<compile_context>
chip_gen: v7x
topology: tpu7x:2x2x1
jax: 0.10.0
libtpu: 0.0.40
codegen_flags: <defaults>
</compile_context>

<pallas_src>
import functools

import numpy as np
import jax
import jax.numpy as jnp
from jax.experimental import pallas as pl
from jax.experimental.pallas import tpu as pltpu


def _round_up(x: int, m: int) -> int:
    return ((x + m - 1) // m) * m


# ----------------------------------------------------------------------------
# Glue: grid subsampling (dynamic output size -> host NumPy) and kNN (top_k).
# TODO(synk): voxel dedup (np.unique) and top-k neighbor search have no clean
#             Pallas equivalent (dynamic output size / sort); kept as NumPy/XLA glue.
# ----------------------------------------------------------------------------
def grid_subsample_fast(points_np: np.ndarray, *, cell_size: float) -> np.ndarray:
    coords = np.floor(points_np / cell_size).astype(np.int64)
    _, inverse, counts = np.unique(
        coords, axis=0, return_inverse=True, return_counts=True
    )
    inverse = inverse.reshape(-1)
    sums = np.zeros((counts.shape[0], points_np.shape[1]), dtype=np.float64)
    np.add.at(sums, inverse, points_np.astype(np.float64))
    return (sums / counts[:, None]).astype(np.float32)


def knn_indices(q_points: jnp.ndarray, s_points: jnp.ndarray, k: int) -> jnp.ndarray:
    d2 = jnp.sum((q_points[:, None, :] - s_points[None, :, :]) ** 2, axis=-1)
    _, idx = jax.lax.top_k(-d2, k)
    return idx  # (M, k)


# ----------------------------------------------------------------------------
# Pallas kernel: KPConv hot path.  One grid step handles TM query points
# (TM on the lane axis), fully lane-dense.
# ----------------------------------------------------------------------------
def _kpconv_kernel(ndiff_ref, nfeat_ref, w_ref, out_ref, fk_ref, *, kp_xyz, inv_sigma):
    # ndiff_ref : (3,      NB, TM)  neighbor_xyz - query_xyz
    # nfeat_ref : (C_pad,  NB, TM)  gathered neighbor features
    # w_ref     : (C_out_pad, Kp*C_pad)  flattened weights (resident)
    # out_ref   : (C_out_pad, TM)
    # fk_ref    : VMEM scratch (Kp*C_pad, TM)
    ndiff = ndiff_ref[...]                      # (3, NB, TM) f32
    nfeat = nfeat_ref[...]                      # (C_pad, NB, TM) f32
    c_pad = nfeat_ref.shape[0]

    dx = ndiff[0]                               # (NB, TM)
    dy = ndiff[1]
    dz = ndiff[2]

    for k, (kx, ky, kz) in enumerate(kp_xyz):   # static unroll over kernel points
        ddx = dx - kx                           # compile-time scalar offsets
        ddy = dy - ky
        ddz = dz - kz
        d = jnp.sqrt(ddx * ddx + ddy * ddy + ddz * ddz)        # (NB, TM), exact form
        infl = jnp.maximum(0.0, 1.0 - d * inv_sigma)           # linear influence
        # Weighted neighbor-feature sum -> (C_pad, TM); static sublane-aligned
        # store into the fused-K scratch (offset k*C_pad, C_pad % 8 == 0).
        fk_ref[k * c_pad:(k + 1) * c_pad, :] = jnp.sum(
            infl[None, :, :] * nfeat, axis=1
        )

    # Single fused MXU matmul: (C_out_pad, Kp*C_pad) @ (Kp*C_pad, TM).
    out_ref[...] = jnp.dot(
        w_ref[...], fk_ref[...], preferred_element_type=jnp.float32
    )


def kpconv_pallas(ndiff_t, nfeat_t, w_t, kp_xyz, *, sigma, tile_m):
    # ndiff_t: (3, NB, M_pad)  nfeat_t: (C_pad, NB, M_pad)  w_t: (C_out_pad, Kp*C_pad)
    _, nb, m_pad = ndiff_t.shape
    c_pad = nfeat_t.shape[0]
    c_out_pad, kc = w_t.shape
    kp = len(kp_xyz)
    assert kc == kp * c_pad
    assert m_pad % tile_m == 0 and tile_m % 128 == 0

    kernel = functools.partial(
        _kpconv_kernel, kp_xyz=kp_xyz, inv_sigma=float(1.0 / sigma)
    )

    # Advisory cost estimate so XLA can schedule/overlap the kNN + gather around
    # the custom call.
    flops = 2 * m_pad * kc * c_out_pad + m_pad * nb * kp * (8 + 2 * c_pad)
    bytes_accessed = 4 * (ndiff_t.size + nfeat_t.size + w_t.size + m_pad * c_out_pad)

    out = pl.pallas_call(
        kernel,
        out_shape=jax.ShapeDtypeStruct((c_out_pad, m_pad), jnp.float32),
        grid=(m_pad // tile_m,),
        in_specs=[
            pl.BlockSpec((3, nb, tile_m), lambda i: (0, 0, i)),
            pl.BlockSpec((c_pad, nb, tile_m), lambda i: (0, 0, i)),
            pl.BlockSpec((c_out_pad, kc), lambda i: (0, 0)),      # resident weights
        ],
        out_specs=pl.BlockSpec((c_out_pad, tile_m), lambda i: (0, i)),
        scratch_shapes=[pltpu.VMEM((kc, tile_m), jnp.float32)],
        compiler_params=pltpu.CompilerParams(
            dimension_semantics=("parallel",),   # disjoint output tiles -> megacore OK
            vmem_limit_bytes=32 * 1024 * 1024,   # flattened blocks are tiny; safe on all gens
        ),
        cost_estimate=pl.CostEstimate(
            flops=int(flops),
            transcendentals=int(m_pad * nb * kp),
            bytes_accessed=int(bytes_accessed),
        ),
    )(ndiff_t, nfeat_t, w_t)
    return out  # (C_out_pad, M_pad)


# kNN + transposed gather + KPConv fused under one jit.
# TODO(synk): at production point counts, move the gather in-kernel via
#             PrefetchScalarGridSpec (idx as scalar prefetch, features in HBM with
#             per-tile DMA gathers) to avoid materializing the (M, NB, C) tensor.
@functools.partial(jax.jit,
                   static_argnames=("kp_xyz", "neighbor_count", "sigma", "tile_m"))
def _knn_gather_kpconv(sub_points, points, features, weights, *,
                       kp_xyz, neighbor_count, sigma, tile_m):
    m = sub_points.shape[0]
    _, c_in = features.shape
    kp, c_in_w, c_out = weights.shape
    assert c_in_w == c_in and kp == len(kp_xyz)

    # Channel padding: C_in to a sublane multiple (8), C_out to a lane multiple (128).
    c_pad = _round_up(max(c_in, 1), 8)
    c_out_pad = _round_up(max(c_out, 1), 128)

    # Lane-axis tile: multiple of 128, capped so we get >= 2 grid steps when M
    # allows it (v7x has 2 TensorCores; no effect on v5e/v6e).
    tm = _round_up(max(int(tile_m), 128), 128)
    half = _round_up(max((m + 1) // 2, 1), 128)
    tm = max(128, min(tm, half))
    m_pad = _round_up(m, tm)

    # Pad the SMALL query array (not the big gathered tensors) to the tile grid.
    sub_q = jnp.pad(sub_points, ((0, m_pad - m), (0, 0)))
    idx = knn_indices(sub_q, points, neighbor_count)          # (M_pad, NB)
    idx_t = idx.T                                             # (NB, M_pad)

    # Gather directly into the query-on-lanes layout (no post-gather transpose
    # of the NB-expanded tensors).
    feats_p = jnp.pad(features, ((0, 0), (0, c_pad - c_in)))  # (N, C_pad)
    nfeat_t = jnp.take(feats_p.T, idx_t, axis=1)              # (C_pad, NB, M_pad)
    ndiff_t = jnp.take(points.T, idx_t, axis=1) - sub_q.T[:, None, :]  # (3, NB, M_pad)

    # Flatten weights to (C_out_pad, Kp*C_pad) so the kernel runs ONE matmul.
    w_p = jnp.pad(weights, ((0, 0), (0, c_pad - c_in), (0, 0)))        # (Kp, C_pad, C_out)
    w_t = jnp.pad(w_p.reshape(kp * c_pad, c_out).T,
                  ((0, c_out_pad - c_out), (0, 0)))                    # (C_out_pad, Kp*C_pad)

    out_t = kpconv_pallas(ndiff_t, nfeat_t, w_t, kp_xyz, sigma=sigma, tile_m=tm)
    return out_t[:c_out, :m].T                                # (M, C_out)


# ----------------------------------------------------------------------------
# Module wrapper mirroring GridKpConvPool.forward
# ----------------------------------------------------------------------------
class GridKpConvPoolPallas:
    def __init__(self, *, cell_size, feature_count, kernel, weights,
                 neighbor_count: int = 10, sigma: float | None = None,
                 tile_m: int = 512):
        self.cell_size = float(cell_size)
        self.feature_count = feature_count
        kp_np = np.asarray(kernel, dtype=np.float32)
        # Kernel points are fixed module constants -> baked in as compile-time scalars.
        self.kp_xyz = tuple((float(x), float(y), float(z)) for x, y, z in kp_np)
        self.kernel_points = jnp.asarray(kp_np)       # kept for reference checks
        self.weights = weights                        # (Kp, C_in, C_out)
        self.neighbor_count = int(neighbor_count)
        # KP influence extent (KPConv convention: ~1.5 * subsampling cell)
        self.sigma = float(sigma) if sigma is not None else 1.5 * self.cell_size
        self.tile_m = int(tile_m)

    def __call__(self, points: jnp.ndarray, features: jnp.ndarray):
        # 1. grid subsample (host side, mirrors points.numpy() in the torch module)
        sub_points = jnp.asarray(
            grid_subsample_fast(np.asarray(points), cell_size=self.cell_size)
        )
        # 2+3. neighbor search + gather + KPConv hot path (Pallas), one jitted graph.
        out = _knn_gather_kpconv(sub_points, points, features, self.weights,
                                 kp_xyz=self.kp_xyz,
                                 neighbor_count=self.neighbor_count,
                                 sigma=self.sigma, tile_m=self.tile_m)
        return sub_points, out


# Pure-JAX f32 reference for correctness checking.
def kpconv_reference(nfeat, ndiff, kpts, weights, sigma):
    delta = ndiff[:, :, None, :] - kpts[None, None, :, :]       # (M, NB, Kp, 3)
    d = jnp.sqrt(jnp.sum(delta * delta, axis=-1))               # (M, NB, Kp)
    infl = jnp.maximum(0.0, 1.0 - d / sigma)                    # (M, NB, Kp)
    wf = jnp.einsum("mnk,mnc->mkc", infl, nfeat)                # (M, Kp, C)
    return jnp.einsum("mkc,kco->mo", wf, weights)               # (M, C_out)


if __name__ == "__main__":
    key = jax.random.PRNGKey(0)
    k_pts, k_feat, k_w = jax.random.split(key, 3)

    N = 128          # input points
    C = 8            # feature_count
    KP = 8           # kernel points
    NB = 10          # neighbor_count (from module)
    cell_size = 0.25
    sigma = 1.5 * cell_size

    points = jax.random.uniform(k_pts, (N, 3), dtype=jnp.float32)
    features = jax.random.normal(k_feat, (N, C), dtype=jnp.float32)

    # Deterministic kernel point positions: center + axis/diagonal offsets.
    dirs = np.array(
        [[0, 0, 0], [1, 0, 0], [-1, 0, 0], [0, 1, 0],
         [0, -1, 0], [0, 0, 1], [0, 0, -1], [1, 1, 1]], dtype=np.float32)
    norms = np.maximum(np.linalg.norm(dirs, axis=1, keepdims=True), 1.0)
    kernel_points = jnp.asarray(dirs / norms * (0.66 * sigma))

    # Deterministic KPConv weights (Kp, C_in, C_out).
    weights = (jax.random.normal(k_w, (KP, C, C), dtype=jnp.float32)
               / np.sqrt(KP * C)).astype(jnp.float32)

    module = GridKpConvPoolPallas(
        cell_size=cell_size, feature_count=C, kernel=kernel_points,
        weights=weights, neighbor_count=NB, sigma=sigma)

    sub_points, out_feats = module(points, features)
    jax.block_until_ready(out_feats)

    # Correctness check vs pure-JAX f32 reference (kernel is f32 end-to-end).
    idx = knn_indices(sub_points, points, NB)
    nfeat = jnp.take(features, idx, axis=0)
    ndiff = jnp.take(points, idx, axis=0) - sub_points[:, None, :]
    ref = kpconv_reference(nfeat, ndiff, kernel_points, weights, sigma)
    np.testing.assert_allclose(np.asarray(out_feats), np.asarray(ref),
                               rtol=2e-2, atol=2e-2)

    print("KERNEL_OK")
</pallas_src>

<mosaic_0001>
module attributes {stable_mosaic.version = 11 : i64} {
  func.func @_kpconv_kernel(%arg0: i32, %arg1: memref<3x10x128xf32, #tpu.memory_space<vmem>>, %arg2: memref<8x10x128xf32, #tpu.memory_space<vmem>>, %arg3: memref<128x64xf32, #tpu.memory_space<vmem>>, %arg4: memref<128x128xf32, #tpu.memory_space<vmem>>, %arg5: memref<64x128xf32, #tpu.memory_space<vmem>>) attributes {dimension_semantics = [#tpu.dimension_semantics<parallel>], iteration_bounds = array<i64: 1>, scalar_prefetch = 0 : i64, scratch_operands = 1 : i64, tpu.core_type = #tpu.core_type<tc>, window_params = [{transform_indices = @transform_0, window_bounds = array<i64: 3, 10, 128>}, {transform_indices = @transform_1, window_bounds = array<i64: 8, 10, 128>}, {pipeline_mode = #tpu.pipeline_mode<synchronous>, transform_indices = @transform_2, window_bounds = array<i64: 128, 64>}, {transform_indices = @transform_3, window_bounds = array<i64: 128, 128>}]} {
    %c0 = arith.constant 0 : index
    %c0_0 = arith.constant 0 : index
    %c0_1 = arith.constant 0 : index
    %0 = vector.load %arg1[%c0, %c0_0, %c0_1] : memref<3x10x128xf32, #tpu.memory_space<vmem>>, vector<3x10x128xf32>
    %c0_2 = arith.constant 0 : index
    %c0_3 = arith.constant 0 : index
    %c0_4 = arith.constant 0 : index
    %1 = vector.load %arg2[%c0_2, %c0_3, %c0_4] : memref<8x10x128xf32, #tpu.memory_space<vmem>>, vector<8x10x128xf32>
    %2 = vector.extract_strided_slice %0 {offsets = [0, 0, 0], sizes = [1, 10, 128], strides = [1, 1, 1]} : vector<3x10x128xf32> to vector<1x10x128xf32>
    %3 = vector.shape_cast %2 : vector<1x10x128xf32> to vector<10x128xf32>
    %4 = vector.extract_strided_slice %0 {offsets = [1, 0, 0], sizes = [1, 10, 128], strides = [1, 1, 1]} : vector<3x10x128xf32> to vector<1x10x128xf32>
    %5 = vector.shape_cast %4 : vector<1x10x128xf32> to vector<10x128xf32>
    %6 = vector.extract_strided_slice %0 {offsets = [2, 0, 0], sizes = [1, 10, 128], strides = [1, 1, 1]} : vector<3x10x128xf32> to vector<1x10x128xf32>
    %7 = vector.shape_cast %6 : vector<1x10x128xf32> to vector<10x128xf32>
    %cst = arith.constant 0.000000e+00 : f32
    %8 = vector.broadcast %cst : f32 to vector<10x128xf32>
    %9 = arith.subf %3, %8 : vector<10x128xf32>
    %cst_5 = arith.constant 0.000000e+00 : f32
    %10 = vector.broadcast %cst_5 : f32 to vector<10x128xf32>
    %11 = arith.subf %5, %10 : vector<10x128xf32>
    %cst_6 = arith.constant 0.000000e+00 : f32
    %12 = vector.broadcast %cst_6 : f32 to vector<10x128xf32>
    %13 = arith.subf %7, %12 : vector<10x128xf32>
    %14 = arith.mulf %9, %9 : vector<10x128xf32>
    %15 = arith.mulf %11, %11 : vector<10x128xf32>
    %16 = arith.addf %14, %15 : vector<10x128xf32>
    %17 = arith.mulf %13, %13 : vector<10x128xf32>
    %18 = arith.addf %16, %17 : vector<10x128xf32>
    %19 = math.sqrt %18 : vector<10x128xf32>
    %cst_7 = arith.constant 2.66666675 : f32
    %20 = vector.broadcast %cst_7 : f32 to vector<10x128xf32>
    %21 = arith.mulf %19, %20 : vector<10x128xf32>
    %cst_8 = arith.constant 1.000000e+00 : f32
    %22 = vector.broadcast %cst_8 : f32 to vector<10x128xf32>
    %23 = arith.subf %22, %21 : vector<10x128xf32>
    %cst_9 = arith.constant 0.000000e+00 : f32
    %24 = vector.broadcast %cst_9 : f32 to vector<10x128xf32>
    %25 = arith.maximumf %24, %23 : vector<10x128xf32>
    %26 = vector.shape_cast %25 : vector<10x128xf32> to vector<1x10x128xf32>
    %27 = vector.broadcast %26 : vector<1x10x128xf32> to vector<8x10x128xf32>
    %28 = arith.mulf %27, %1 : vector<8x10x128xf32>
    %cst_10 = arith.constant dense<0.000000e+00> : vector<8x128xf32>
    %29 = vector.multi_reduction <add>, %28, %cst_10 [1] : vector<8x10x128xf32> to vector<8x128xf32>
    %c0_11 = arith.constant 0 : index
    %c0_12 = arith.constant 0 : index
    %30 = vector.load %arg5[%c0_11, %c0_12] : memref<64x128xf32, #tpu.memory_space<vmem>>, vector<8x128xf32>
    tpu.vector_store %arg5[%c0_11, %c0_12], %29 {strides = array<i32>} : memref<64x128xf32, #tpu.memory_space<vmem>>, vector<8x128xf32>,
    %cst_13 = arith.constant 2.475000e-01 : f32
    %31 = vector.broadcast %cst_13 : f32 to vector<10x128xf32>
    %32 = arith.subf %3, %31 : vector<10x128xf32>
    %cst_14 = arith.constant 0.000000e+00 : f32
    %33 = vector.broadcast %cst_14 : f32 to vector<10x128xf32>
    %34 = arith.subf %5, %33 : vector<10x128xf32>
    %cst_15 = arith.constant 0.000000e+00 : f32
    %35 = vector.broadcast %cst_15 : f32 to vector<10x128xf32>
    %36 = arith.subf %7, %35 : vector<10x128xf32>
    %37 = arith.mulf %32, %32 : vector<10x128xf32>
    %38 = arith.mulf %34, %34 : vector<10x128xf32>
    %39 = arith.addf %37, %38 : vector<10x128xf32>
    %40 = arith.mulf %36, %36 : vector<10x128xf32>
    %41 = arith.addf %39, %40 : vector<10x128xf32>
    %42 = math.sqrt %41 : vector<10x128xf32>
    %cst_16 = arith.constant 2.66666675 : f32
    %43 = vector.broadcast %cst_16 : f32 to vector<10x128xf32>
    %44 = arith.mulf %42, %43 : vector<10x128xf32>
    %cst_17 = arith.constant 1.000000e+00 : f32
    %45 = vector.broadcast %cst_17 : f32 to vector<10x128xf32>
    %46 = arith.subf %45, %44 : vector<10x128xf32>
    %cst_18 = arith.constant 0.000000e+00 : f32
    %47 = vector.broadcast %cst_18 : f32 to vector<10x128xf32>
    %48 = arith.maximumf %47, %46 : vector<10x128xf32>
    %49 = vector.shape_cast %48 : vector<10x128xf32> to vector<1x10x128xf32>
    %50 = vector.broadcast %49 : vector<1x10x128xf32> to vector<8x10x128xf32>
    %51 = arith.mulf %50, %1 : vector<8x10x128xf32>
    %cst_19 = arith.constant dense<0.000000e+00> : vector<8x128xf32>
    %52 = vector.multi_reduction <add>, %51, %cst_19 [1] : vector<8x10x128xf32> to vector<8x128xf32>
    %c8 = arith.constant 8 : index
    %c0_20 = arith.constant 0 : index
    %53 = vector.load %arg5[%c8, %c0_20] : memref<64x128xf32, #tpu.memory_space<vmem>>, vector<8x128xf32>
    tpu.vector_store %arg5[%c8, %c0_20], %52 {strides = array<i32>} : memref<64x128xf32, #tpu.memory_space<vmem>>, vector<8x128xf32>,
    %cst_21 = arith.constant -2.475000e-01 : f32
    %54 = vector.broadcast %cst_21 : f32 to vector<10x128xf32>
    %55 = arith.subf %3, %54 : vector<10x128xf32>
    %cst_22 = arith.constant 0.000000e+00 : f32
    %56 = vector.broadcast %cst_22 : f32 to vector<10x128xf32>
    %57 = arith.subf %5, %56 : vector<10x128xf32>
    %cst_23 = arith.constant 0.000000e+00 : f32
    %58 = vector.broadcast %cst_23 : f32 to vector<10x128xf32>
    %59 = arith.subf %7, %58 : vector<10x128xf32>
    %60 = arith.mulf %55, %55 : vector<10x128xf32>
    %61 = arith.mulf %57, %57 : vector<10x128xf32>
    %62 = arith.addf %60, %61 : vector<10x128xf32>
    %63 = arith.mulf %59, %59 : vector<10x128xf32>
    %64 = arith.addf %62, %63 : vector<10x128xf32>
    %65 = math.sqrt %64 : vector<10x128xf32>
    %cst_24 = arith.constant 2.66666675 : f32
    %66 = vector.broadcast %cst_24 : f32 to vector<10x128xf32>
    %67 = arith.mulf %65, %66 : vector<10x128xf32>
    %cst_25 = arith.constant 1.000000e+00 : f32
    %68 = vector.broadcast %cst_25 : f32 to vector<10x128xf32>
    %69 = arith.subf %68, %67 : vector<10x128xf32>
    %cst_26 = arith.constant 0.000000e+00 : f32
    %70 = vector.broadcast %cst_26 : f32 to vector<10x128xf32>
    %71 = arith.maximumf %70, %69 : vector<10x128xf32>
    %72 = vector.shape_cast %71 : vector<10x128xf32> to vector<1x10x128xf32>
    %73 = vector.broadcast %72 : vector<1x10x128xf32> to vector<8x10x128xf32>
    %74 = arith.mulf %73, %1 : vector<8x10x128xf32>
    %cst_27 = arith.constant dense<0.000000e+00> : vector<8x128xf32>
    %75 = vector.multi_reduction <add>, %74, %cst_27 [1] : vector<8x10x128xf32> to vector<8x128xf32>
    %c16 = arith.constant 16 : index
    %c0_28 = arith.constant 0 : index
    %76 = vector.load %arg5[%c16, %c0_28] : memref<64x128xf32, #tpu.memory_space<vmem>>, vector<8x128xf32>
    tpu.vector_store %arg5[%c16, %c0_28], %75 {strides = array<i32>} : memref<64x128xf32, #tpu.memory_space<vmem>>, vector<8x128xf32>,
    %cst_29 = arith.constant 0.000000e+00 : f32
    %77 = vector.broadcast %cst_29 : f32 to vector<10x128xf32>
    %78 = arith.subf %3, %77 : vector<10x128xf32>
    %cst_30 = arith.constant 2.475000e-01 : f32
    %79 = vector.broadcast %cst_30 : f32 to vector<10x128xf32>
    %80 = arith.subf %5, %79 : vector<10x128xf32>
    %cst_31 = arith.constant 0.000000e+00 : f32
    %81 = vector.broadcast %cst_31 : f32 to vector<10x128xf32>
    %82 = arith.subf %7, %81 : vector<10x128xf32>
    %83 = arith.mulf %78, %78 : vector<10x128xf32>
    %84 = arith.mulf %80, %80 : vector<10x128xf32>
    %85 = arith.addf %83, %84 : vector<10x128xf32>
    %86 = arith.mulf %82, %82 : vector<10x128xf32>
    %87 = arith.addf %85, %86 : vector<10x128xf32>
    %88 = math.sqrt %87 : vector<10x128xf32>
    %cst_32 = arith.constant 2.66666675 : f32
    %89 = vector.broadcast %cst_32 : f32 to vector<10x128xf32>
    %90 = arith.mulf %88, %89 : vector<10x128xf32>
    %cst_33 = arith.constant 1.000000e+00 : f32
    %91 = vector.broadcast %cst_33 : f32 to vector<10x128xf32>
    %92 = arith.subf %91, %90 : vector<10x128xf32>
    %cst_34 = arith.constant 0.000000e+00 : f32
    %93 = vector.broadcast %cst_34 : f32 to vector<10x128xf32>
    %94 = arith.maximumf %93, %92 : vector<10x128xf32>
    %95 = vector.shape_cast %94 : vector<10x128xf32> to vector<1x10x128xf32>
    %96 = vector.broadcast %95 : vector<1x10x128xf32> to vector<8x10x128xf32>
    %97 = arith.mulf %96, %1 : vector<8x10x128xf32>
    %cst_35 = arith.constant dense<0.000000e+00> : vector<8x128xf32>
    %98 = vector.multi_reduction <add>, %97, %cst_35 [1] : vector<8x10x128xf32> to vector<8x128xf32>
    %c24 = arith.constant 24 : index
    %c0_36 = arith.constant 0 : index
    %99 = vector.load %arg5[%c24, %c0_36] : memref<64x128xf32, #tpu.memory_space<vmem>>, vector<8x128xf32>
    tpu.vector_store %arg5[%c24, %c0_36], %98 {strides = array<i32>} : memref<64x128xf32, #tpu.memory_space<vmem>>, vector<8x128xf32>,
    %cst_37 = arith.constant 0.000000e+00 : f32
    %100 = vector.broadcast %cst_37 : f32 to vector<10x128xf32>
    %101 = arith.subf %3, %100 : vector<10x128xf32>
    %cst_38 = arith.constant -2.475000e-01 : f32
    %102 = vector.broadcast %cst_38 : f32 to vector<10x128xf32>
    %103 = arith.subf %5, %102 : vector<10x128xf32>
    %cst_39 = arith.constant 0.000000e+00 : f32
    %104 = vector.broadcast %cst_39 : f32 to vector<10x128xf32>
    %105 = arith.subf %7, %104 : vector<10x128xf32>
    %106 = arith.mulf %101, %101 : vector<10x128xf32>
    %107 = arith.mulf %103, %103 : vector<10x128xf32>
    %108 = arith.addf %106, %107 : vector<10x128xf32>
    %109 = arith.mulf %105, %105 : vector<10x128xf32>
    %110 = arith.addf %108, %109 : vector<10x128xf32>
    %111 = math.sqrt %110 : vector<10x128xf32>
    %cst_40 = arith.constant 2.66666675 : f32
    %112 = vector.broadcast %cst_40 : f32 to vector<10x128xf32>
    %113 = arith.mulf %111, %112 : vector<10x128xf32>
    %cst_41 = arith.constant 1.000000e+00 : f32
    %114 = vector.broadcast %cst_41 : f32 to vector<10x128xf32>
    %115 = arith.subf %114, %113 : vector<10x128xf32>
    %cst_42 = arith.constant 0.000000e+00 : f32
    %116 = vector.broadcast %cst_42 : f32 to vector<10x128xf32>
    %117 = arith.maximumf %116, %115 : vector<10x128xf32>
    %118 = vector.shape_cast %117 : vector<10x128xf32> to vector<1x10x128xf32>
    %119 = vector.broadcast %118 : vector<1x10x128xf32> to vector<8x10x128xf32>
    %120 = arith.mulf %119, %1 : vector<8x10x128xf32>
    %cst_43 = arith.constant dense<0.000000e+00> : vector<8x128xf32>
    %121 = vector.multi_reduction <add>, %120, %cst_43 [1] : vector<8x10x128xf32> to vector<8x128xf32>
    %c32 = arith.constant 32 : index
    %c0_44 = arith.constant 0 : index
    %122 = vector.load %arg5[%c32, %c0_44] : memref<64x128xf32, #tpu.memory_space<vmem>>, vector<8x128xf32>
    tpu.vector_store %arg5[%c32, %c0_44], %121 {strides = array<i32>} : memref<64x128xf32, #tpu.memory_space<vmem>>, vector<8x128xf32>,
    %cst_45 = arith.constant 0.000000e+00 : f32
    %123 = vector.broadcast %cst_45 : f32 to vector<10x128xf32>
    %124 = arith.subf %3, %123 : vector<10x128xf32>
    %cst_46 = arith.constant 0.000000e+00 : f32
    %125 = vector.broadcast %cst_46 : f32 to vector<10x128xf32>
    %126 = arith.subf %5, %125 : vector<10x128xf32>
    %cst_47 = arith.constant 2.475000e-01 : f32
    %127 = vector.broadcast %cst_47 : f32 to vector<10x128xf32>
    %128 = arith.subf %7, %127 : vector<10x128xf32>
    %129 = arith.mulf %124, %124 : vector<10x128xf32>
    %130 = arith.mulf %126, %126 : vector<10x128xf32>
    %131 = arith.addf %129, %130 : vector<10x128xf32>
    %132 = arith.mulf %128, %128 : vector<10x128xf32>
    %133 = arith.addf %131, %132 : vector<10x128xf32>
    %134 = math.sqrt %133 : vector<10x128xf32>
    %cst_48 = arith.constant 2.66666675 : f32
    %135 = vector.broadcast %cst_48 : f32 to vector<10x128xf32>
    %136 = arith.mulf %134, %135 : vector<10x128xf32>
    %cst_49 = arith.constant 1.000000e+00 : f32
    %137 = vector.broadcast %cst_49 : f32 to vector<10x128xf32>
    %138 = arith.subf %137, %136 : vector<10x128xf32>
    %cst_50 = arith.constant 0.000000e+00 : f32
    %139 = vector.broadcast %cst_50 : f32 to vector<10x128xf32>
    %140 = arith.maximumf %139, %138 : vector<10x128xf32>
    %141 = vector.shape_cast %140 : vector<10x128xf32> to vector<1x10x128xf32>
    %142 = vector.broadcast %141 : vector<1x10x128xf32> to vector<8x10x128xf32>
    %143 = arith.mulf %142, %1 : vector<8x10x128xf32>
    %cst_51 = arith.constant dense<0.000000e+00> : vector<8x128xf32>
    %144 = vector.multi_reduction <add>, %143, %cst_51 [1] : vector<8x10x128xf32> to vector<8x128xf32>
    %c40 = arith.constant 40 : index
    %c0_52 = arith.constant 0 : index
    %145 = vector.load %arg5[%c40, %c0_52] : memref<64x128xf32, #tpu.memory_space<vmem>>, vector<8x128xf32>
    tpu.vector_store %arg5[%c40, %c0_52], %144 {strides = array<i32>} : memref<64x128xf32, #tpu.memory_space<vmem>>, vector<8x128xf32>,
    %cst_53 = arith.constant 0.000000e+00 : f32
    %146 = vector.broadcast %cst_53 : f32 to vector<10x128xf32>
    %147 = arith.subf %3, %146 : vector<10x128xf32>
    %cst_54 = arith.constant 0.000000e+00 : f32
    %148 = vector.broadcast %cst_54 : f32 to vector<10x128xf32>
    %149 = arith.subf %5, %148 : vector<10x128xf32>
    %cst_55 = arith.constant -2.475000e-01 : f32
    %150 = vector.broadcast %cst_55 : f32 to vector<10x128xf32>
    %151 = arith.subf %7, %150 : vector<10x128xf32>
    %152 = arith.mulf %147, %147 : vector<10x128xf32>
    %153 = arith.mulf %149, %149 : vector<10x128xf32>
    %154 = arith.addf %152, %153 : vector<10x128xf32>
    %155 = arith.mulf %151, %151 : vector<10x128xf32>
    %156 = arith.addf %154, %155 : vector<10x128xf32>
    %157 = math.sqrt %156 : vector<10x128xf32>
    %cst_56 = arith.constant 2.66666675 : f32
    %158 = vector.broadcast %cst_56 : f32 to vector<10x128xf32>
    %159 = arith.mulf %157, %158 : vector<10x128xf32>
    %cst_57 = arith.constant 1.000000e+00 : f32
    %160 = vector.broadcast %cst_57 : f32 to vector<10x128xf32>
    %161 = arith.subf %160, %159 : vector<10x128xf32>
    %cst_58 = arith.constant 0.000000e+00 : f32
    %162 = vector.broadcast %cst_58 : f32 to vector<10x128xf32>
    %163 = arith.maximumf %162, %161 : vector<10x128xf32>
    %164 = vector.shape_cast %163 : vector<10x128xf32> to vector<1x10x128xf32>
    %165 = vector.broadcast %164 : vector<1x10x128xf32> to vector<8x10x128xf32>
    %166 = arith.mulf %165, %1 : vector<8x10x128xf32>
    %cst_59 = arith.constant dense<0.000000e+00> : vector<8x128xf32>
    %167 = vector.multi_reduction <add>, %166, %cst_59 [1] : vector<8x10x128xf32> to vector<8x128xf32>
    %c48 = arith.constant 48 : index
    %c0_60 = arith.constant 0 : index
    %168 = vector.load %arg5[%c48, %c0_60] : memref<64x128xf32, #tpu.memory_space<vmem>>, vector<8x128xf32>
    tpu.vector_store %arg5[%c48, %c0_60], %167 {strides = array<i32>} : memref<64x128xf32, #tpu.memory_space<vmem>>, vector<8x128xf32>,
    %cst_61 = arith.constant 0.142894194 : f32
    %169 = vector.broadcast %cst_61 : f32 to vector<10x128xf32>
    %170 = arith.subf %3, %169 : vector<10x128xf32>
    %cst_62 = arith.constant 0.142894194 : f32
    %171 = vector.broadcast %cst_62 : f32 to vector<10x128xf32>
    %172 = arith.subf %5, %171 : vector<10x128xf32>
    %cst_63 = arith.constant 0.142894194 : f32
    %173 = vector.broadcast %cst_63 : f32 to vector<10x128xf32>
    %174 = arith.subf %7, %173 : vector<10x128xf32>
    %175 = arith.mulf %170, %170 : vector<10x128xf32>
    %176 = arith.mulf %172, %172 : vector<10x128xf32>
    %177 = arith.addf %175, %176 : vector<10x128xf32>
    %178 = arith.mulf %174, %174 : vector<10x128xf32>
    %179 = arith.addf %177, %178 : vector<10x128xf32>
    %180 = math.sqrt %179 : vector<10x128xf32>
    %cst_64 = arith.constant 2.66666675 : f32
    %181 = vector.broadcast %cst_64 : f32 to vector<10x128xf32>
    %182 = arith.mulf %180, %181 : vector<10x128xf32>
    %cst_65 = arith.constant 1.000000e+00 : f32
    %183 = vector.broadcast %cst_65 : f32 to vector<10x128xf32>
    %184 = arith.subf %183, %182 : vector<10x128xf32>
    %cst_66 = arith.constant 0.000000e+00 : f32
    %185 = vector.broadcast %cst_66 : f32 to vector<10x128xf32>
    %186 = arith.maximumf %185, %184 : vector<10x128xf32>
    %187 = vector.shape_cast %186 : vector<10x128xf32> to vector<1x10x128xf32>
    %188 = vector.broadcast %187 : vector<1x10x128xf32> to vector<8x10x128xf32>
    %189 = arith.mulf %188, %1 : vector<8x10x128xf32>
    %cst_67 = arith.constant dense<0.000000e+00> : vector<8x128xf32>
    %190 = vector.multi_reduction <add>, %189, %cst_67 [1] : vector<8x10x128xf32> to vector<8x128xf32>
    %c56 = arith.constant 56 : index
    %c0_68 = arith.constant 0 : index
    %191 = vector.load %arg5[%c56, %c0_68] : memref<64x128xf32, #tpu.memory_space<vmem>>, vector<8x128xf32>
    tpu.vector_store %arg5[%c56, %c0_68], %190 {strides = array<i32>} : memref<64x128xf32, #tpu.memory_space<vmem>>, vector<8x128xf32>,
    %c0_69 = arith.constant 0 : index
    %c0_70 = arith.constant 0 : index
    %192 = vector.load %arg3[%c0_69, %c0_70] : memref<128x64xf32, #tpu.memory_space<vmem>>, vector<128x64xf32>
    %c0_71 = arith.constant 0 : index
    %c0_72 = arith.constant 0 : index
    %193 = vector.load %arg5[%c0_71, %c0_72] : memref<64x128xf32, #tpu.memory_space<vmem>>, vector<64x128xf32>
    %cst_73 = arith.constant dense<0.000000e+00> : vector<128x128xf32>
    %194 = tpu.matmul %192, %193, %cst_73 {dimension_numbers = #tpu.dot_dimension_numbers<[1], [0], [0], [1], [0, 0, 1, 1], [], []>} : vector<128x64xf32>, vector<64x128xf32>, vector<128x128xf32> -> vector<128x128xf32>
    %c0_74 = arith.constant 0 : index
    %c0_75 = arith.constant 0 : index
    %195 = vector.load %arg4[%c0_74, %c0_75] : memref<128x128xf32, #tpu.memory_space<vmem>>, vector<128x128xf32>
    tpu.vector_store %arg4[%c0_74, %c0_75], %194 {strides = array<i32>} : memref<128x128xf32, #tpu.memory_space<vmem>>, vector<128x128xf32>,
    return
  }
  func.func @transform_0(%arg0: i32) -> (i32, i32, i32) {
    %c0_i32 = arith.constant 0 : i32
    %c0_i32_0 = arith.constant 0 : i32
    %c0_i32_1 = arith.constant 0 : i32
    return %c0_i32, %c0_i32_0, %arg0 : i32, i32, i32
  }
  func.func @transform_1(%arg0: i32) -> (i32, i32, i32) {
    %c0_i32 = arith.constant 0 : i32
    %c0_i32_0 = arith.constant 0 : i32
    %c0_i32_1 = arith.constant 0 : i32
    return %c0_i32, %c0_i32_0, %arg0 : i32, i32, i32
  }
  func.func @transform_2(%arg0: i32) -> (i32, i32) {
    %c0_i32 = arith.constant 0 : i32
    %c0_i32_0 = arith.constant 0 : i32
    %c0_i32_1 = arith.constant 0 : i32
    return %c0_i32, %c0_i32_0 : i32, i32
  }
  func.func @transform_3(%arg0: i32) -> (i32, i32) {
    %c0_i32 = arith.constant 0 : i32
    %c0_i32_0 = arith.constant 0 : i32
    return %c0_i32, %arg0 : i32, i32
  }
}

</mosaic_0001>

<llo_original>
// kernel: neg.1
$region0: #{neg.1}
  #allocation0 [shape = 's32[1]{0}', space=sflag, size = 0x4, scoped, tag = 'scoped memory for neg.1']
  %s0 = inlined_call_operand.vmem [shape: f32[128,128], index: 0, kind: input, shape index: {}]
  %s1 = inlined_call_operand.vmem [shape: f32[128,128], index: 1, kind: output, shape index: {}]
  %v2 = vld [vmem:[%s0] sm:$0xff]
  %3 = xla_tuple %v2
  %4 = xla_tuple %3
  %v5 = vxor.u32 %v2, 2147483648
  %6 = xla_tuple %v5
  %7 = vst [vmem:[%s1] sm:$0xff] %v5
  %s8 = scalar_lea.vmem %s0, 8
  %v9 = vld [vmem:[%s8] sm:$0xff]
  %10 = xla_tuple %v9
  %11 = xla_tuple %10
  %v12 = vxor.u32 %v9, 2147483648
  %13 = xla_tuple %v12
  %s14 = scalar_lea.vmem %s1, 8
  %15 = vst [vmem:[%s14] sm:$0xff] %v12
  %s16 = scalar_lea.vmem %s0, 16
  %v17 = vld [vmem:[%s16] sm:$0xff]
  %18 = xla_tuple %v17
  %19 = xla_tuple %18
  %v20 = vxor.u32 %v17, 2147483648
  %21 = xla_tuple %v20
  %s22 = scalar_lea.vmem %s1, 16
  %23 = vst [vmem:[%s22] sm:$0xff] %v20
  %s24 = scalar_lea.vmem %s0, 24
  %v25 = vld [vmem:[%s24] sm:$0xff]
  %26 = xla_tuple %v25
  %27 = xla_tuple %26
  %v28 = vxor.u32 %v25, 2147483648
  %29 = xla_tuple %v28
  %s30 = scalar_lea.vmem %s1, 24
  %31 = vst [vmem:[%s30] sm:$0xff] %v28
  %s32 = scalar_lea.vmem %s0, 32
  %v33 = vld [vmem:[%s32] sm:$0xff]
  %34 = xla_tuple %v33
  %35 = xla_tuple %34
  %v36 = vxor.u32 %v33, 2147483648
  %37 = xla_tuple %v36
  %s38 = scalar_lea.vmem %s1, 32
  %39 = vst [vmem:[%s38] sm:$0xff] %v36
  %s40 = scalar_lea.vmem %s0, 40
  %v41 = vld [vmem:[%s40] sm:$0xff]
  %42 = xla_tuple %v41
  %43 = xla_tuple %42
  %v44 = vxor.u32 %v41, 2147483648
  %45 = xla_tuple %v44
  %s46 = scalar_lea.vmem %s1, 40
  %47 = vst [vmem:[%s46] sm:$0xff] %v44
  %s48 = scalar_lea.vmem %s0, 48
  %v49 = vld [vmem:[%s48] sm:$0xff]
  %50 = xla_tuple %v49
  %51 = xla_tuple %50
  %v52 = vxor.u32 %v49, 2147483648
  %53 = xla_tuple %v52
  %s54 = scalar_lea.vmem %s1, 48
  %55 = vst [vmem:[%s54] sm:$0xff] %v52
  %s56 = scalar_lea.vmem %s0, 56
  %v57 = vld [vmem:[%s56] sm:$0xff]
  %58 = xla_tuple %v57
  %59 = xla_tuple %58
  %v60 = vxor.u32 %v57, 2147483648
  %61 = xla_tuple %v60
  %s62 = scalar_lea.vmem %s1, 56
  %63 = vst [vmem:[%s62] sm:$0xff] %v60
  %s64 = scalar_lea.vmem %s0, 64
  %v65 = vld [vmem:[%s64] sm:$0xff]
  %66 = xla_tuple %v65
  %67 = xla_tuple %66
  %v68 = vxor.u32 %v65, 2147483648
  %69 = xla_tuple %v68
  %s70 = scalar_lea.vmem %s1, 64
  %71 = vst [vmem:[%s70] sm:$0xff] %v68
  %s72 = scalar_lea.vmem %s0, 72
  %v73 = vld [vmem:[%s72] sm:$0xff]
  %74 = xla_tuple %v73
  %75 = xla_tuple %74
  %v76 = vxor.u32 %v73, 2147483648
  %77 = xla_tuple %v76
  %s78 = scalar_lea.vmem %s1, 72
  %79 = vst [vmem:[%s78] sm:$0xff] %v76
  %s80 = scalar_lea.vmem %s0, 80
  %v81 = vld [vmem:[%s80] sm:$0xff]
  %82 = xla_tuple %v81
  %83 = xla_tuple %82
  %v84 = vxor.u32 %v81, 2147483648
  %85 = xla_tuple %v84
  %s86 = scalar_lea.vmem %s1, 80
  %87 = vst [vmem:[%s86] sm:$0xff] %v84
  %s88 = scalar_lea.vmem %s0, 88
  %v89 = vld [vmem:[%s88] sm:$0xff]
  %90 = xla_tuple %v89
  %91 = xla_tuple %90
  %v92 = vxor.u32 %v89, 2147483648
  %93 = xla_tuple %v92
  %s94 = scalar_lea.vmem %s1, 88
  %95 = vst [vmem:[%s94] sm:$0xff] %v92
  %s96 = scalar_lea.vmem %s0, 96
  %v97 = vld [vmem:[%s96] sm:$0xff]
  %98 = xla_tuple %v97
  %99 = xla_tuple %98
  %v100 = vxor.u32 %v97, 2147483648
  %101 = xla_tuple %v100
  %s102 = scalar_lea.vmem %s1, 96
  %103 = vst [vmem:[%s102] sm:$0xff] %v100
  %s104 = scalar_lea.vmem %s0, 104
  %v105 = vld [vmem:[%s104] sm:$0xff]
  %106 = xla_tuple %v105
  %107 = xla_tuple %106
  %v108 = vxor.u32 %v105, 2147483648
  %109 = xla_tuple %v108
  %s110 = scalar_lea.vmem %s1, 104
  %111 = vst [vmem:[%s110] sm:$0xff] %v108
  %s112 = scalar_lea.vmem %s0, 112
  %v113 = vld [vmem:[%s112] sm:$0xff]
  %114 = xla_tuple %v113
  %115 = xla_tuple %114
  %v116 = vxor.u32 %v113, 2147483648
  %117 = xla_tuple %v116
  %s118 = scalar_lea.vmem %s1, 112
  %119 = vst [vmem:[%s118] sm:$0xff] %v116
  %s120 = scalar_lea.vmem %s0, 120
  %v121 = vld [vmem:[%s120] sm:$0xff]
  %122 = xla_tuple %v121
  %123 = xla_tuple %122
  %v124 = vxor.u32 %v121, 2147483648
  %125 = xla_tuple %v124
  %s126 = scalar_lea.vmem %s1, 120
  %127 = vst [vmem:[%s126] sm:$0xff] %v124

// kernel: _knn_gather_kpconv.1
$region0: #{_knn_gather_kpconv.1}
  #allocation0 [shape = 'u32[]', space=smem, size = 0x4, offset = 0x4, fixed_abs, tag = 'smem constant byte address 0x4 - core index']
  #allocation1 [shape = 'u32[144,128]{1,0:T(1,128)}', space=vmem, size = 0x12000, scoped, tag = 'internal scratch']
  #allocation2 [shape = 'f32[64,128]{1,0:T(8,128)}', space=vmem, size = 0x8000, scoped, tag = 'scratch operand']
  %s0 = inlined_call_operand.vmem [shape: f32[3,10,128], index: 0, kind: input, shape index: {}]
  %s1 = inlined_call_operand.vmem [shape: f32[8,10,128], index: 1, kind: input, shape index: {}]
  %s2 = inlined_call_operand.vmem [shape: f32[128,64], index: 2, kind: input, shape index: {}]
  %s3 = inlined_call_operand.vmem [shape: f32[128,128], index: 3, kind: output, shape index: {}]
  %s4 = sld [smem:[#allocation0]]
  $region22: #{_knn_gather_kpconv.1} parent=0
    _
  %s6 = ssub.s32 1, %s4
  %s7 = scalar_select 0, %s6, %s4
  // Predicated region
  $region2: #{_knn_gather_kpconv.1} parent=0 // pred_check
    _
  $region3: #{_knn_gather_kpconv.1} parent=0 // pred_check_branch
    %9 = sbr.rel (0) target = $region5
  $region4: #{_knn_gather_kpconv.1} parent=0 // pred_region
    _
  $region5: #{_knn_gather_kpconv.1} parent=0 // pred_fallthru
    _
  // Predicated region
  $region6: #{_knn_gather_kpconv.1} parent=0 // pred_check
    _
  $region7: #{_knn_gather_kpconv.1} parent=0 // pred_check_branch
    %11 = sbr.rel (0) target = $region9
  $region8: #{_knn_gather_kpconv.1} parent=0 // pred_region
    _
  $region9: #{_knn_gather_kpconv.1} parent=0 // pred_fallthru
    _
  // Predicated region
  $region10: #{_knn_gather_kpconv.1} parent=0 // pred_check
    _
  $region11: #{_knn_gather_kpconv.1} parent=0 // pred_check_branch
    %13 = sbr.rel (0) target = $region13
  $region12: #{_knn_gather_kpconv.1} parent=0 // pred_region
    _
  $region13: #{_knn_gather_kpconv.1} parent=0 // pred_fallthru
    _
  %v14 = vld [vmem:[%s0] sm:$0xff]
  %v15 = vld [vmem:[%s0 + $0x8] sm:$0x3]
  %v16 = vld [vmem:[%s0 + $0x10] sm:$0xff]
  %v17 = vld [vmem:[%s0 + $0x18] sm:$0x3]
  %v18 = vld [vmem:[%s0 + $0x20] sm:$0xff]
  %v19 = vld [vmem:[%s0 + $0x28] sm:$0x3]
  %v20 = vld [vmem:[%s1] sm:$0xff]
  %v21 = vld [vmem:[%s1 + $0x8] sm:$0x3]
  %v22 = vld [vmem:[%s1 + $0x10] sm:$0xff]
  %v23 = vld [vmem:[%s1 + $0x18] sm:$0x3]
  %v24 = vld [vmem:[%s1 + $0x20] sm:$0xff]
  %v25 = vld [vmem:[%s1 + $0x28] sm:$0x3]
  %v26 = vld [vmem:[%s1 + $0x30] sm:$0xff]
  %v27 = vld [vmem:[%s1 + $0x38] sm:$0x3]
  %v28 = vld [vmem:[%s1 + $0x40] sm:$0xff]
  %v29 = vld [vmem:[%s1 + $0x48] sm:$0x3]
  %v30 = vld [vmem:[%s1 + $0x50] sm:$0xff]
  %v31 = vld [vmem:[%s1 + $0x58] sm:$0x3]
  %v32 = vld [vmem:[%s1 + $0x60] sm:$0xff]
  %v33 = vld [vmem:[%s1 + $0x68] sm:$0x3]
  %v34 = vld [vmem:[%s1 + $0x70] sm:$0xff]
  %v35 = vld [vmem:[%s1 + $0x78] sm:$0x3]
  %v36 = vmul.f32 %v14, %v14
  %v37 = vmul.f32 %v15, %v15
  %v38 = vmul.f32 %v16, %v16
  %v39 = vmul.f32 %v17, %v17
  %v40 = vadd.f32 %v36, %v38
  %v41 = vadd.f32 %v37, %v39
  %v42 = vmul.f32 %v18, %v18
  %v43 = vmul.f32 %v19, %v19
  %v44 = vadd.f32 %v40, %v42
  %v45 = vadd.f32 %v41, %v43
  %v46 = vrsqrt.pop %v44
  %v47 = vmul.f32 %v44, %v46
  %vm48 = vcmp.eq.f32.partialorder %v44, inf
  %v49 = vsel %vm48, %v44, %v47
  %vm50 = vcmp.eq.f32.partialorder %v44, 0.0
  %v51 = vand.u32 %v44, 2147483648
  %v52 = vsel %vm50, %v51, %v49
  %v53 = vrsqrt.pop %v45
  %v54 = vmul.f32 %v45, %v53
  %vm55 = vcmp.eq.f32.partialorder %v45, inf
  %v56 = vsel %vm55, %v45, %v54
  %vm57 = vcmp.eq.f32.partialorder %v45, 0.0
  %v58 = vand.u32 %v45, 2147483648
  %v59 = vsel %vm57, %v58, %v56
  %v60 = vmul.f32 %v52, 2.6666667
  %v61 = vmul.f32 %v59, 2.6666667
  %v62 = vsub.f32 1.0, %v60
  %v63 = vsub.f32 1.0, %v61
  %v64 = vmax.f32 %v62, 0.0
  %v65 = vmax.f32 %v63, 0.0
  %v66 = vmul.f32 %v64, %v20
  %v67 = vmul.f32 %v65, %v21
  %v68 = vmul.f32 %v64, %v22
  %v69 = vmul.f32 %v65, %v23
  %v70 = vmul.f32 %v64, %v24
  %v71 = vmul.f32 %v65, %v25
  %v72 = vmul.f32 %v64, %v26
  %v73 = vmul.f32 %v65, %v27
  %v74 = vmul.f32 %v64, %v28
  %v75 = vmul.f32 %v65, %v29
  %v76 = vmul.f32 %v64, %v30
  %v77 = vmul.f32 %v65, %v31
  %v78 = vmul.f32 %v64, %v32
  %v79 = vmul.f32 %v65, %v33
  %v80 = vmul.f32 %v64, %v34
  %v81 = vmul.f32 %v65, %v35
  %vm82 = vcmask 1041408
  %v83 = vsel %vm82, %v67, 0.0
  %v84 = vadd.f32 %v66, %v83
  %v85 = vrot.slane %v84, 4
  %v86 = vadd.f32 %v84, %v85
  %v87 = vrot.slane %v86, 2
  %v88 = vadd.f32 %v86, %v87
  %v89 = vrot.slane %v88, 1
  %v90 = vadd.f32 %v88, %v89
  %v91 = vsel %vm82, %v69, 0.0
  %v92 = vadd.f32 %v68, %v91
  %v93 = vrot.slane %v92, 4
  %v94 = vadd.f32 %v92, %v93
  %v95 = vrot.slane %v94, 2
  %v96 = vadd.f32 %v94, %v95
  %v97 = vrot.slane %v96, 1
  %v98 = vadd.f32 %v96, %v97
  %v99 = vsel %vm82, %v71, 0.0
  %v100 = vadd.f32 %v70, %v99
  %v101 = vrot.slane %v100, 4
  %v102 = vadd.f32 %v100, %v101
  %v103 = vrot.slane %v102, 2
  %v104 = vadd.f32 %v102, %v103
  %v105 = vrot.slane %v104, 1
  %v106 = vadd.f32 %v104, %v105
  %v107 = vsel %vm82, %v73, 0.0
  %v108 = vadd.f32 %v72, %v107
  %v109 = vrot.slane %v108, 4
  %v110 = vadd.f32 %v108, %v109
  %v111 = vrot.slane %v110, 2
  %v112 = vadd.f32 %v110, %v111
  %v113 = vrot.slane %v112, 1
  %v114 = vadd.f32 %v112, %v113
  %v115 = vsel %vm82, %v75, 0.0
  %v116 = vadd.f32 %v74, %v115
  %v117 = vrot.slane %v116, 4
  %v118 = vadd.f32 %v116, %v117
  %v119 = vrot.slane %v118, 2
  %v120 = vadd.f32 %v118, %v119
  %v121 = vrot.slane %v120, 1
  %v122 = vadd.f32 %v120, %v121
  %v123 = vsel %vm82, %v77, 0.0
  %v124 = vadd.f32 %v76, %v123
  %v125 = vrot.slane %v124, 4
  %v126 = vadd.f32 %v124, %v125
  %v127 = vrot.slane %v126, 2
  %v128 = vadd.f32 %v126, %v127
  %v129 = vrot.slane %v128, 1
  %v130 = vadd.f32 %v128, %v129
  %v131 = vsel %vm82, %v79, 0.0
  %v132 = vadd.f32 %v78, %v131
  %v133 = vrot.slane %v132, 4
  %v134 = vadd.f32 %v132, %v133
  %v135 = vrot.slane %v134, 2
  %v136 = vadd.f32 %v134, %v135
  %v137 = vrot.slane %v136, 1
  %v138 = vadd.f32 %v136, %v137
  %v139 = vsel %vm82, %v81, 0.0
  %v140 = vadd.f32 %v80, %v139
  %v141 = vrot.slane %v140, 4
  %v142 = vadd.f32 %v140, %v141
  %v143 = vrot.slane %v142, 2
  %v144 = vadd.f32 %v142, %v143
  %v145 = vrot.slane %v144, 1
  %v146 = vadd.f32 %v144, %v145
  %vm155 = vcmask 1041409
  %v156 = vsel %vm155, %v98, %v90
  %vm157 = vcmask 1042434
  %v158 = vsel %vm157, %v106, %v156
  %vm159 = vcmask 1043459
  %v160 = vsel %vm159, %v114, %v158
  %vm161 = vcmask 1044484
  %v162 = vsel %vm161, %v122, %v160
  %vm163 = vcmask 1045509
  %v164 = vsel %vm163, %v130, %v162
  %vm165 = vcmask 1046534
  %v166 = vsel %vm165, %v138, %v164
  %vm167 = vcmask 1047559
  %v168 = vsel %vm167, %v146, %v166
  %170 = vst [vmem:[#allocation2] sm:$0xff] %v168
  %v171 = vsub.f32 %v14, 0.2475
  %v172 = vsub.f32 %v15, 0.2475
  %v173 = vmul.f32 %v171, %v171
  %v174 = vmul.f32 %v172, %v172
  %v175 = vadd.f32 %v173, %v38
  %v176 = vadd.f32 %v174, %v39
  %v177 = vadd.f32 %v175, %v42
  %v178 = vadd.f32 %v176, %v43
  %v179 = vrsqrt.pop %v177
  %v180 = vmul.f32 %v177, %v179
  %vm181 = vcmp.eq.f32.partialorder %v177, inf
  %v182 = vsel %vm181, %v177, %v180
  %vm183 = vcmp.eq.f32.partialorder %v177, 0.0
  %v184 = vand.u32 %v177, 2147483648
  %v185 = vsel %vm183, %v184, %v182
  %v186 = vrsqrt.pop %v178
  %v187 = vmul.f32 %v178, %v186
  %vm188 = vcmp.eq.f32.partialorder %v178, inf
  %v189 = vsel %vm188, %v178, %v187
  %vm190 = vcmp.eq.f32.partialorder %v178, 0.0
  %v191 = vand.u32 %v178, 2147483648
  %v192 = vsel %vm190, %v191, %v189
  %v193 = vmul.f32 %v185, 2.6666667
  %v194 = vmul.f32 %v192, 2.6666667
  %v195 = vsub.f32 1.0, %v193
  %v196 = vsub.f32 1.0, %v194
  %v197 = vmax.f32 %v195, 0.0
  %v198 = vmax.f32 %v196, 0.0
  %v199 = vmul.f32 %v197, %v20
  %v200 = vmul.f32 %v198, %v21
  %v201 = vmul.f32 %v197, %v22
  %v202 = vmul.f32 %v198, %v23
  %v203 = vmul.f32 %v197, %v24
  %v204 = vmul.f32 %v198, %v25
  %v205 = vmul.f32 %v197, %v26
  %v206 = vmul.f32 %v198, %v27
  %v207 = vmul.f32 %v197, %v28
  %v208 = vmul.f32 %v198, %v29
  %v209 = vmul.f32 %v197, %v30
  %v210 = vmul.f32 %v198, %v31
  %v211 = vmul.f32 %v197, %v32
  %v212 = vmul.f32 %v198, %v33
  %v213 = vmul.f32 %v197, %v34
  %v214 = vmul.f32 %v198, %v35
  %v215 = vsel %vm82, %v200, 0.0
  %v216 = vadd.f32 %v199, %v215
  %v217 = vrot.slane %v216, 4
  %v218 = vadd.f32 %v216, %v217
  %v219 = vrot.slane %v218, 2
  %v220 = vadd.f32 %v218, %v219
  %v221 = vrot.slane %v220, 1
  %v222 = vadd.f32 %v220, %v221
  %v223 = vsel %vm82, %v202, 0.0
  %v224 = vadd.f32 %v201, %v223
  %v225 = vrot.slane %v224, 4
  %v226 = vadd.f32 %v224, %v225
  %v227 = vrot.slane %v226, 2
  %v228 = vadd.f32 %v226, %v227
  %v229 = vrot.slane %v228, 1
  %v230 = vadd.f32 %v228, %v229
  %v231 = vsel %vm82, %v204, 0.0
  %v232 = vadd.f32 %v203, %v231
  %v233 = vrot.slane %v232, 4
  %v234 = vadd.f32 %v232, %v233
  %v235 = vrot.slane %v234, 2
  %v236 = vadd.f32 %v234, %v235
  %v237 = vrot.slane %v236, 1
  %v238 = vadd.f32 %v236, %v237
  %v239 = vsel %vm82, %v206, 0.0
  %v240 = vadd.f32 %v205, %v239
  %v241 = vrot.slane %v240, 4
  %v242 = vadd.f32 %v240, %v241
  %v243 = vrot.slane %v242, 2
  %v244 = vadd.f32 %v242, %v243
  %v245 = vrot.slane %v244, 1
  %v246 = vadd.f32 %v244, %v245
  %v247 = vsel %vm82, %v208, 0.0
  %v248 = vadd.f32 %v207, %v247
  %v249 = vrot.slane %v248, 4
  %v250 = vadd.f32 %v248, %v249
  %v251 = vrot.slane %v250, 2
  %v252 = vadd.f32 %v250, %v251
  %v253 = vrot.slane %v252, 1
  %v254 = vadd.f32 %v252, %v253
  %v255 = vsel %vm82, %v210, 0.0
  %v256 = vadd.f32 %v209, %v255
  %v257 = vrot.slane %v256, 4
  %v258 = vadd.f32 %v256, %v257
  %v259 = vrot.slane %v258, 2
  %v260 = vadd.f32 %v258, %v259
  %v261 = vrot.slane %v260, 1
  %v262 = vadd.f32 %v260, %v261
  %v263 = vsel %vm82, %v212, 0.0
  %v264 = vadd.f32 %v211, %v263
  %v265 = vrot.slane %v264, 4
  %v266 = vadd.f32 %v264, %v265
  %v267 = vrot.slane %v266, 2
  %v268 = vadd.f32 %v266, %v267
  %v269 = vrot.slane %v268, 1
  %v270 = vadd.f32 %v268, %v269
  %v271 = vsel %vm82, %v214, 0.0
  %v272 = vadd.f32 %v213, %v271
  %v273 = vrot.slane %v272, 4
  %v274 = vadd.f32 %v272, %v273
  %v275 = vrot.slane %v274, 2
  %v276 = vadd.f32 %v274, %v275
  %v277 = vrot.slane %v276, 1
  %v278 = vadd.f32 %v276, %v277
  %v287 = vsel %vm155, %v230, %v222
  %v288 = vsel %vm157, %v238, %v287
  %v289 = vsel %vm159, %v246, %v288
  %v290 = vsel %vm161, %v254, %v289
  %v291 = vsel %vm163, %v262, %v290
  %v292 = vsel %vm165, %v270, %v291
  %v293 = vsel %vm167, %v278, %v292
  %295 = vst [vmem:[#allocation2 + $0x8] sm:$0xff] %v293
  %v296 = vsub.f32 %v14, -0.2475
  %v297 = vsub.f32 %v15, -0.2475
  %v298 = vmul.f32 %v296, %v296
  %v299 = vmul.f32 %v297, %v297
  %v300 = vadd.f32 %v298, %v38
  %v301 = vadd.f32 %v299, %v39
  %v302 = vadd.f32 %v300, %v42
  %v303 = vadd.f32 %v301, %v43
  %v304 = vrsqrt.pop %v302
  %v305 = vmul.f32 %v302, %v304
  %vm306 = vcmp.eq.f32.partialorder %v302, inf
  %v307 = vsel %vm306, %v302, %v305
  %vm308 = vcmp.eq.f32.partialorder %v302, 0.0
  %v309 = vand.u32 %v302, 2147483648
  %v310 = vsel %vm308, %v309, %v307
  %v311 = vrsqrt.pop %v303
  %v312 = vmul.f32 %v303, %v311
  %vm313 = vcmp.eq.f32.partialorder %v303, inf
  %v314 = vsel %vm313, %v303, %v312
  %vm315 = vcmp.eq.f32.partialorder %v303, 0.0
  %v316 = vand.u32 %v303, 2147483648
  %v317 = vsel %vm315, %v316, %v314
  %v318 = vmul.f32 %v310, 2.6666667
  %v319 = vmul.f32 %v317, 2.6666667
  %v320 = vsub.f32 1.0, %v318
  %v321 = vsub.f32 1.0, %v319
  %v322 = vmax.f32 %v320, 0.0
  %v323 = vmax.f32 %v321, 0.0
  %v324 = vmul.f32 %v322, %v20
  %v325 = vmul.f32 %v323, %v21
  %v326 = vmul.f32 %v322, %v22
  %v327 = vmul.f32 %v323, %v23
  %v328 = vmul.f32 %v322, %v24
  %v329 = vmul.f32 %v323, %v25
  %v330 = vmul.f32 %v322, %v26
  %v331 = vmul.f32 %v323, %v27
  %v332 = vmul.f32 %v322, %v28
  %v333 = vmul.f32 %v323, %v29
  %v334 = vmul.f32 %v322, %v30
  %v335 = vmul.f32 %v323, %v31
  %v336 = vmul.f32 %v322, %v32
  %v337 = vmul.f32 %v323, %v33
  %v338 = vmul.f32 %v322, %v34
  %v339 = vmul.f32 %v323, %v35
  %v340 = vsel %vm82, %v325, 0.0
  %v341 = vadd.f32 %v324, %v340
  %v342 = vrot.slane %v341, 4
  %v343 = vadd.f32 %v341, %v342
  %v344 = vrot.slane %v343, 2
  %v345 = vadd.f32 %v343, %v344
  %v346 = vrot.slane %v345, 1
  %v347 = vadd.f32 %v345, %v346
  %v348 = vsel %vm82, %v327, 0.0
  %v349 = vadd.f32 %v326, %v348
  %v350 = vrot.slane %v349, 4
  %v351 = vadd.f32 %v349, %v350
  %v352 = vrot.slane %v351, 2
  %v353 = vadd.f32 %v351, %v352
  %v354 = vrot.slane %v353, 1
  %v355 = vadd.f32 %v353, %v354
  %v356 = vsel %vm82, %v329, 0.0
  %v357 = vadd.f32 %v328, %v356
  %v358 = vrot.slane %v357, 4
  %v359 = vadd.f32 %v357, %v358
  %v360 = vrot.slane %v359, 2
  %v361 = vadd.f32 %v359, %v360
  %v362 = vrot.slane %v361, 1
  %v363 = vadd.f32 %v361, %v362
  %v364 = vsel %vm82, %v331, 0.0
  %v365 = vadd.f32 %v330, %v364
  %v366 = vrot.slane %v365, 4
  %v367 = vadd.f32 %v365, %v366
  %v368 = vrot.slane %v367, 2
  %v369 = vadd.f32 %v367, %v368
  %v370 = vrot.slane %v369, 1
  %v371 = vadd.f32 %v369, %v370
  %v372 = vsel %vm82, %v333, 0.0
  %v373 = vadd.f32 %v332, %v372
  %v374 = vrot.slane %v373, 4
  %v375 = vadd.f32 %v373, %v374
  %v376 = vrot.slane %v375, 2
  %v377 = vadd.f32 %v375, %v376
  %v378 = vrot.slane %v377, 1
  %v379 = vadd.f32 %v377, %v378
  %v380 = vsel %vm82, %v335, 0.0
  %v381 = vadd.f32 %v334, %v380
  %v382 = vrot.slane %v381, 4
  %v383 = vadd.f32 %v381, %v382
  %v384 = vrot.slane %v383, 2
  %v385 = vadd.f32 %v383, %v384
  %v386 = vrot.slane %v385, 1
  %v387 = vadd.f32 %v385, %v386
  %v388 = vsel %vm82, %v337, 0.0
  %v389 = vadd.f32 %v336, %v388
  %v390 = vrot.slane %v389, 4
  %v391 = vadd.f32 %v389, %v390
  %v392 = vrot.slane %v391, 2
  %v393 = vadd.f32 %v391, %v392
  %v394 = vrot.slane %v393, 1
  %v395 = vadd.f32 %v393, %v394
  %v396 = vsel %vm82, %v339, 0.0
  %v397 = vadd.f32 %v338, %v396
  %v398 = vrot.slane %v397, 4
  %v399 = vadd.f32 %v397, %v398
  %v400 = vrot.slane %v399, 2
  %v401 = vadd.f32 %v399, %v400
  %v402 = vrot.slane %v401, 1
  %v403 = vadd.f32 %v401, %v402
  %v412 = vsel %vm155, %v355, %v347
  %v413 = vsel %vm157, %v363, %v412
  %v414 = vsel %vm159, %v371, %v413
  %v415 = vsel %vm161, %v379, %v414
  %v416 = vsel %vm163, %v387, %v415
  %v417 = vsel %vm165, %v395, %v416
  %v418 = vsel %vm167, %v403, %v417
  %420 = vst [vmem:[#allocation2 + $0x10] sm:$0xff] %v418
  %v421 = vsub.f32 %v16, 0.2475
  %v422 = vsub.f32 %v17, 0.2475
  %v423 = vmul.f32 %v421, %v421
  %v424 = vmul.f32 %v422, %v422
  %v425 = vadd.f32 %v36, %v423
  %v426 = vadd.f32 %v37, %v424
  %v427 = vadd.f32 %v425, %v42
  %v428 = vadd.f32 %v426, %v43
  %v429 = vrsqrt.pop %v427
  %v430 = vmul.f32 %v427, %v429
  %vm431 = vcmp.eq.f32.partialorder %v427, inf
  %v432 = vsel %vm431, %v427, %v430
  %vm433 = vcmp.eq.f32.partialorder %v427, 0.0
  %v434 = vand.u32 %v427, 2147483648
  %v435 = vsel %vm433, %v434, %v432
  %v436 = vrsqrt.pop %v428
  %v437 = vmul.f32 %v428, %v436
  %vm438 = vcmp.eq.f32.partialorder %v428, inf
  %v439 = vsel %vm438, %v428, %v437
  %vm440 = vcmp.eq.f32.partialorder %v428, 0.0
  %v441 = vand.u32 %v428, 2147483648
  %v442 = vsel %vm440, %v441, %v439
  %v443 = vmul.f32 %v435, 2.6666667
  %v444 = vmul.f32 %v442, 2.6666667
  %v445 = vsub.f32 1.0, %v443
  %v446 = vsub.f32 1.0, %v444
  %v447 = vmax.f32 %v445, 0.0
  %v448 = vmax.f32 %v446, 0.0
  %v449 = vmul.f32 %v447, %v20
  %v450 = vmul.f32 %v448, %v21
  %v451 = vmul.f32 %v447, %v22
  %v452 = vmul.f32 %v448, %v23
  %v453 = vmul.f32 %v447, %v24
  %v454 = vmul.f32 %v448, %v25
  %v455 = vmul.f32 %v447, %v26
  %v456 = vmul.f32 %v448, %v27
  %v457 = vmul.f32 %v447, %v28
  %v458 = vmul.f32 %v448, %v29
  %v459 = vmul.f32 %v447, %v30
  %v460 = vmul.f32 %v448, %v31
  %v461 = vmul.f32 %v447, %v32
  %v462 = vmul.f32 %v448, %v33
  %v463 = vmul.f32 %v447, %v34
  %v464 = vmul.f32 %v448, %v35
  %v465 = vsel %vm82, %v450, 0.0
  %v466 = vadd.f32 %v449, %v465
  %v467 = vrot.slane %v466, 4
  %v468 = vadd.f32 %v466, %v467
  %v469 = vrot.slane %v468, 2
  %v470 = vadd.f32 %v468, %v469
  %v471 = vrot.slane %v470, 1
  %v472 = vadd.f32 %v470, %v471
  %v473 = vsel %vm82, %v452, 0.0
  %v474 = vadd.f32 %v451, %v473
  %v475 = vrot.slane %v474, 4
  %v476 = vadd.f32 %v474, %v475
  %v477 = vrot.slane %v476, 2
  %v478 = vadd.f32 %v476, %v477
  %v479 = vrot.slane %v478, 1
  %v480 = vadd.f32 %v478, %v479
  %v481 = vsel %vm82, %v454, 0.0
  %v482 = vadd.f32 %v453, %v481
  %v483 = vrot.slane %v482, 4
  %v484 = vadd.f32 %v482, %v483
  %v485 = vrot.slane %v484, 2
  %v486 = vadd.f32 %v484, %v485
  %v487 = vrot.slane %v486, 1
  %v488 = vadd.f32 %v486, %v487
  %v489 = vsel %vm82, %v456, 0.0
  %v490 = vadd.f32 %v455, %v489
  %v491 = vrot.slane %v490, 4
  %v492 = vadd.f32 %v490, %v491
  %v493 = vrot.slane %v492, 2
  %v494 = vadd.f32 %v492, %v493
  %v495 = vrot.slane %v494, 1
  %v496 = vadd.f32 %v494, %v495
  %v497 = vsel %vm82, %v458, 0.0
  %v498 = vadd.f32 %v457, %v497
  %v499 = vrot.slane %v498, 4
  %v500 = vadd.f32 %v498, %v499
  %v501 = vrot.slane %v500, 2
  %v502 = vadd.f32 %v500, %v501
  %v503 = vrot.slane %v502, 1
  %v504 = vadd.f32 %v502, %v503
  %v505 = vsel %vm82, %v460, 0.0
  %v506 = vadd.f32 %v459, %v505
  %v507 = vrot.slane %v506, 4
  %v508 = vadd.f32 %v506, %v507
  %v509 = vrot.slane %v508, 2
  %v510 = vadd.f32 %v508, %v509
  %v511 = vrot.slane %v510, 1
  %v512 = vadd.f32 %v510, %v511
  %v513 = vsel %vm82, %v462, 0.0
  %v514 = vadd.f32 %v461, %v513
  %v515 = vrot.slane %v514, 4
  %v516 = vadd.f32 %v514, %v515
  %v517 = vrot.slane %v516, 2
  %v518 = vadd.f32 %v516, %v517
  %v519 = vrot.slane %v518, 1
  %v520 = vadd.f32 %v518, %v519
  %v521 = vsel %vm82, %v464, 0.0
  %v522 = vadd.f32 %v463, %v521
  %v523 = vrot.slane %v522, 4
  %v524 = vadd.f32 %v522, %v523
  %v525 = vrot.slane %v524, 2
  %v526 = vadd.f32 %v524, %v525
  %v527 = vrot.slane %v526, 1
  %v528 = vadd.f32 %v526, %v527
  %v537 = vsel %vm155, %v480, %v472
  %v538 = vsel %vm157, %v488, %v537
  %v539 = vsel %vm159, %v496, %v538
  %v540 = vsel %vm161, %v504, %v539
  %v541 = vsel %vm163, %v512, %v540
  %v542 = vsel %vm165, %v520, %v541
  %v543 = vsel %vm167, %v528, %v542
  %545 = vst [vmem:[#allocation2 + $0x18] sm:$0xff] %v543
  %v546 = vsub.f32 %v16, -0.2475
  %v547 = vsub.f32 %v17, -0.2475
  %v548 = vmul.f32 %v546, %v546
  %v549 = vmul.f32 %v547, %v547
  %v550 = vadd.f32 %v36, %v548
  %v551 = vadd.f32 %v37, %v549
  %v552 = vadd.f32 %v550, %v42
  %v553 = vadd.f32 %v551, %v43
  %v554 = vrsqrt.pop %v552
  %v555 = vmul.f32 %v552, %v554
  %vm556 = vcmp.eq.f32.partialorder %v552, inf
  %v557 = vsel %vm556, %v552, %v555
  %vm558 = vcmp.eq.f32.partialorder %v552, 0.0
  %v559 = vand.u32 %v552, 2147483648
  %v560 = vsel %vm558, %v559, %v557
  %v561 = vrsqrt.pop %v553
  %v562 = vmul.f32 %v553, %v561
  %vm563 = vcmp.eq.f32.partialorder %v553, inf
  %v564 = vsel %vm563, %v553, %v562
  %vm565 = vcmp.eq.f32.partialorder %v553, 0.0
  %v566 = vand.u32 %v553, 2147483648
  %v567 = vsel %vm565, %v566, %v564
  %v568 = vmul.f32 %v560, 2.6666667
  %v569 = vmul.f32 %v567, 2.6666667
  %v570 = vsub.f32 1.0, %v568
  %v571 = vsub.f32 1.0, %v569
  %v572 = vmax.f32 %v570, 0.0
  %v573 = vmax.f32 %v571, 0.0
  %v574 = vmul.f32 %v572, %v20
  %v575 = vmul.f32 %v573, %v21
  %v576 = vmul.f32 %v572, %v22
  %v577 = vmul.f32 %v573, %v23
  %v578 = vmul.f32 %v572, %v24
  %v579 = vmul.f32 %v573, %v25
  %v580 = vmul.f32 %v572, %v26
  %v581 = vmul.f32 %v573, %v27
  %v582 = vmul.f32 %v572, %v28
  %v583 = vmul.f32 %v573, %v29
  %v584 = vmul.f32 %v572, %v30
  %v585 = vmul.f32 %v573, %v31
  %v586 = vmul.f32 %v572, %v32
  %v587 = vmul.f32 %v573, %v33
  %v588 = vmul.f32 %v572, %v34
  %v589 = vmul.f32 %v573, %v35
  %v590 = vsel %vm82, %v575, 0.0
  %v591 = vadd.f32 %v574, %v590
  %v592 = vrot.slane %v591, 4
  %v593 = vadd.f32 %v591, %v592
  %v594 = vrot.slane %v593, 2
  %v595 = vadd.f32 %v593, %v594
  %v596 = vrot.slane %v595, 1
  %v597 = vadd.f32 %v595, %v596
  %v598 = vsel %vm82, %v577, 0.0
  %v599 = vadd.f32 %v576, %v598
  %v600 = vrot.slane %v599, 4
  %v601 = vadd.f32 %v599, %v600
  %v602 = vrot.slane %v601, 2
  %v603 = vadd.f32 %v601, %v602
  %v604 = vrot.slane %v603, 1
  %v605 = vadd.f32 %v603, %v604
  %v606 = vsel %vm82, %v579, 0.0
  %v607 = vadd.f32 %v578, %v606
  %v608 = vrot.slane %v607, 4
  %v609 = vadd.f32 %v607, %v608
  %v610 = vrot.slane %v609, 2
  %v611 = vadd.f32 %v609, %v610
  %v612 = vrot.slane %v611, 1
  %v613 = vadd.f32 %v611, %v612
  %v614 = vsel %vm82, %v581, 0.0
  %v615 = vadd.f32 %v580, %v614
  %v616 = vrot.slane %v615, 4
  %v617 = vadd.f32 %v615, %v616
  %v618 = vrot.slane %v617, 2
  %v619 = vadd.f32 %v617, %v618
  %v620 = vrot.slane %v619, 1
  %v621 = vadd.f32 %v619, %v620
  %v622 = vsel %vm82, %v583, 0.0
  %v623 = vadd.f32 %v582, %v622
  %v624 = vrot.slane %v623, 4
  %v625 = vadd.f32 %v623, %v624
  %v626 = vrot.slane %v625, 2
  %v627 = vadd.f32 %v625, %v626
  %v628 = vrot.slane %v627, 1
  %v629 = vadd.f32 %v627, %v628
  %v630 = vsel %vm82, %v585, 0.0
  %v631 = vadd.f32 %v584, %v630
  %v632 = vrot.slane %v631, 4
  %v633 = vadd.f32 %v631, %v632
  %v634 = vrot.slane %v633, 2
  %v635 = vadd.f32 %v633, %v634
  %v636 = vrot.slane %v635, 1
  %v637 = vadd.f32 %v635, %v636
  %v638 = vsel %vm82, %v587, 0.0
  %v639 = vadd.f32 %v586, %v638
  %v640 = vrot.slane %v639, 4
  %v641 = vadd.f32 %v639, %v640
  %v642 = vrot.slane %v641, 2
  %v643 = vadd.f32 %v641, %v642
  %v644 = vrot.slane %v643, 1
  %v645 = vadd.f32 %v643, %v644
  %v646 = vsel %vm82, %v589, 0.0
  %v647 = vadd.f32 %v588, %v646
  %v648 = vrot.slane %v647, 4
  %v649 = vadd.f32 %v647, %v648
  %v650 = vrot.slane %v649, 2
  %v651 = vadd.f32 %v649, %v650
  %v652 = vrot.slane %v651, 1
  %v653 = vadd.f32 %v651, %v652
  %v662 = vsel %vm155, %v605, %v597
  %v663 = vsel %vm157, %v613, %v662
  %v664 = vsel %vm159, %v621, %v663
  %v665 = vsel %vm161, %v629, %v664
  %v666 = vsel %vm163, %v637, %v665
  %v667 = vsel %vm165, %v645, %v666
  %v668 = vsel %vm167, %v653, %v667
  %670 = vst [vmem:[#allocation2 + $0x20] sm:$0xff] %v668
  %v671 = vsub.f32 %v18, 0.2475
  %v672 = vsub.f32 %v19, 0.2475
  %v673 = vmul.f32 %v671, %v671
  %v674 = vmul.f32 %v672, %v672
  %v675 = vadd.f32 %v40, %v673
  %v676 = vadd.f32 %v41, %v674
  %v677 = vrsqrt.pop %v675
  %v678 = vmul.f32 %v675, %v677
  %vm679 = vcmp.eq.f32.partialorder %v675, inf
  %v680 = vsel %vm679, %v675, %v678
  %vm681 = vcmp.eq.f32.partialorder %v675, 0.0
  %v682 = vand.u32 %v675, 2147483648
  %v683 = vsel %vm681, %v682, %v680
  %v684 = vrsqrt.pop %v676
  %v685 = vmul.f32 %v676, %v684
  %vm686 = vcmp.eq.f32.partialorder %v676, inf
  %v687 = vsel %vm686, %v676, %v685
  %vm688 = vcmp.eq.f32.partialorder %v676, 0.0
  %v689 = vand.u32 %v676, 2147483648
  %v690 = vsel %vm688, %v689, %v687
  %v691 = vmul.f32 %v683, 2.6666667
  %v692 = vmul.f32 %v690, 2.6666667
  %v693 = vsub.f32 1.0, %v691
  %v694 = vsub.f32 1.0, %v692
  %v695 = vmax.f32 %v693, 0.0
  %v696 = vmax.f32 %v694, 0.0
  %v697 = vmul.f32 %v695, %v20
  %v698 = vmul.f32 %v696, %v21
  %v699 = vmul.f32 %v695, %v22
  %v700 = vmul.f32 %v696, %v23
  %v701 = vmul.f32 %v695, %v24
  %v702 = vmul.f32 %v696, %v25
  %v703 = vmul.f32 %v695, %v26
  %v704 = vmul.f32 %v696, %v27
  %v705 = vmul.f32 %v695, %v28
  %v706 = vmul.f32 %v696, %v29
  %v707 = vmul.f32 %v695, %v30
  %v708 = vmul.f32 %v696, %v31
  %v709 = vmul.f32 %v695, %v32
  %v710 = vmul.f32 %v696, %v33
  %v711 = vmul.f32 %v695, %v34
  %v712 = vmul.f32 %v696, %v35
  %v713 = vsel %vm82, %v698, 0.0
  %v714 = vadd.f32 %v697, %v713
  %v715 = vrot.slane %v714, 4
  %v716 = vadd.f32 %v714, %v715
  %v717 = vrot.slane %v716, 2
  %v718 = vadd.f32 %v716, %v717
  %v719 = vrot.slane %v718, 1
  %v720 = vadd.f32 %v718, %v719
  %v721 = vsel %vm82, %v700, 0.0
  %v722 = vadd.f32 %v699, %v721
  %v723 = vrot.slane %v722, 4
  %v724 = vadd.f32 %v722, %v723
  %v725 = vrot.slane %v724, 2
  %v726 = vadd.f32 %v724, %v725
  %v727 = vrot.slane %v726, 1
  %v728 = vadd.f32 %v726, %v727
  %v729 = vsel %vm82, %v702, 0.0
  %v730 = vadd.f32 %v701, %v729
  %v731 = vrot.slane %v730, 4
  %v732 = vadd.f32 %v730, %v731
  %v733 = vrot.slane %v732, 2
  %v734 = vadd.f32 %v732, %v733
  %v735 = vrot.slane %v734, 1
  %v736 = vadd.f32 %v734, %v735
  %v737 = vsel %vm82, %v704, 0.0
  %v738 = vadd.f32 %v703, %v737
  %v739 = vrot.slane %v738, 4
  %v740 = vadd.f32 %v738, %v739
  %v741 = vrot.slane %v740, 2
  %v742 = vadd.f32 %v740, %v741
  %v743 = vrot.slane %v742, 1
  %v744 = vadd.f32 %v742, %v743
  %v745 = vsel %vm82, %v706, 0.0
  %v746 = vadd.f32 %v705, %v745
  %v747 = vrot.slane %v746, 4
  %v748 = vadd.f32 %v746, %v747
  %v749 = vrot.slane %v748, 2
  %v750 = vadd.f32 %v748, %v749
  %v751 = vrot.slane %v750, 1
  %v752 = vadd.f32 %v750, %v751
  %v753 = vsel %vm82, %v708, 0.0
  %v754 = vadd.f32 %v707, %v753
  %v755 = vrot.slane %v754, 4
  %v756 = vadd.f32 %v754, %v755
  %v757 = vrot.slane %v756, 2
  %v758 = vadd.f32 %v756, %v757
  %v759 = vrot.slane %v758, 1
  %v760 = vadd.f32 %v758, %v759
  %v761 = vsel %vm82, %v710, 0.0
  %v762 = vadd.f32 %v709, %v761
  %v763 = vrot.slane %v762, 4
  %v764 = vadd.f32 %v762, %v763
  %v765 = vrot.slane %v764, 2
  %v766 = vadd.f32 %v764, %v765
  %v767 = vrot.slane %v766, 1
  %v768 = vadd.f32 %v766, %v767
  %v769 = vsel %vm82, %v712, 0.0
  %v770 = vadd.f32 %v711, %v769
  %v771 = vrot.slane %v770, 4
  %v772 = vadd.f32 %v770, %v771
  %v773 = vrot.slane %v772, 2
  %v774 = vadd.f32 %v772, %v773
  %v775 = vrot.slane %v774, 1
  %v776 = vadd.f32 %v774, %v775
  %v785 = vsel %vm155, %v728, %v720
  %v786 = vsel %vm157, %v736, %v785
  %v787 = vsel %vm159, %v744, %v786
  %v788 = vsel %vm161, %v752, %v787
  %v789 = vsel %vm163, %v760, %v788
  %v790 = vsel %vm165, %v768, %v789
  %v791 = vsel %vm167, %v776, %v790
  %793 = vst [vmem:[#allocation2 + $0x28] sm:$0xff] %v791
  %v794 = vsub.f32 %v18, -0.2475
  %v795 = vsub.f32 %v19, -0.2475
  %v796 = vmul.f32 %v794, %v794
  %v797 = vmul.f32 %v795, %v795
  %v798 = vadd.f32 %v40, %v796
  %v799 = vadd.f32 %v41, %v797
  %v800 = vrsqrt.pop %v798
  %v801 = vmul.f32 %v798, %v800
  %vm802 = vcmp.eq.f32.partialorder %v798, inf
  %v803 = vsel %vm802, %v798, %v801
  %vm804 = vcmp.eq.f32.partialorder %v798, 0.0
  %v805 = vand.u32 %v798, 2147483648
  %v806 = vsel %vm804, %v805, %v803
  %v807 = vrsqrt.pop %v799
  %v808 = vmul.f32 %v799, %v807
  %vm809 = vcmp.eq.f32.partialorder %v799, inf
  %v810 = vsel %vm809, %v799, %v808
  %vm811 = vcmp.eq.f32.partialorder %v799, 0.0
  %v812 = vand.u32 %v799, 2147483648
  %v813 = vsel %vm811, %v812, %v810
  %v814 = vmul.f32 %v806, 2.6666667
  %v815 = vmul.f32 %v813, 2.6666667
  %v816 = vsub.f32 1.0, %v814
  %v817 = vsub.f32 1.0, %v815
  %v818 = vmax.f32 %v816, 0.0
  %v819 = vmax.f32 %v817, 0.0
  %v820 = vmul.f32 %v818, %v20
  %v821 = vmul.f32 %v819, %v21
  %v822 = vmul.f32 %v818, %v22
  %v823 = vmul.f32 %v819, %v23
  %v824 = vmul.f32 %v818, %v24
  %v825 = vmul.f32 %v819, %v25
  %v826 = vmul.f32 %v818, %v26
  %v827 = vmul.f32 %v819, %v27
  %v828 = vmul.f32 %v818, %v28
  %v829 = vmul.f32 %v819, %v29
  %v830 = vmul.f32 %v818, %v30
  %v831 = vmul.f32 %v819, %v31
  %v832 = vmul.f32 %v818, %v32
  %v833 = vmul.f32 %v819, %v33
  %v834 = vmul.f32 %v818, %v34
  %v835 = vmul.f32 %v819, %v35
  %v836 = vsel %vm82, %v821, 0.0
  %v837 = vadd.f32 %v820, %v836
  %v838 = vrot.slane %v837, 4
  %v839 = vadd.f32 %v837, %v838
  %v840 = vrot.slane %v839, 2
  %v841 = vadd.f32 %v839, %v840
  %v842 = vrot.slane %v841, 1
  %v843 = vadd.f32 %v841, %v842
  %v844 = vsel %vm82, %v823, 0.0
  %v845 = vadd.f32 %v822, %v844
  %v846 = vrot.slane %v845, 4
  %v847 = vadd.f32 %v845, %v846
  %v848 = vrot.slane %v847, 2
  %v849 = vadd.f32 %v847, %v848
  %v850 = vrot.slane %v849, 1
  %v851 = vadd.f32 %v849, %v850
  %v852 = vsel %vm82, %v825, 0.0
  %v853 = vadd.f32 %v824, %v852
  %v854 = vrot.slane %v853, 4
  %v855 = vadd.f32 %v853, %v854
  %v856 = vrot.slane %v855, 2
  %v857 = vadd.f32 %v855, %v856
  %v858 = vrot.slane %v857, 1
  %v859 = vadd.f32 %v857, %v858
  %v860 = vsel %vm82, %v827, 0.0
  %v861 = vadd.f32 %v826, %v860
  %v862 = vrot.slane %v861, 4
  %v863 = vadd.f32 %v861, %v862
  %v864 = vrot.slane %v863, 2
  %v865 = vadd.f32 %v863, %v864
  %v866 = vrot.slane %v865, 1
  %v867 = vadd.f32 %v865, %v866
  %v868 = vsel %vm82, %v829, 0.0
  %v869 = vadd.f32 %v828, %v868
  %v870 = vrot.slane %v869, 4
  %v871 = vadd.f32 %v869, %v870
  %v872 = vrot.slane %v871, 2
  %v873 = vadd.f32 %v871, %v872
  %v874 = vrot.slane %v873, 1
  %v875 = vadd.f32 %v873, %v874
  %v876 = vsel %vm82, %v831, 0.0
  %v877 = vadd.f32 %v830, %v876
  %v878 = vrot.slane %v877, 4
  %v879 = vadd.f32 %v877, %v878
  %v880 = vrot.slane %v879, 2
  %v881 = vadd.f32 %v879, %v880
  %v882 = vrot.slane %v881, 1
  %v883 = vadd.f32 %v881, %v882
  %v884 = vsel %vm82, %v833, 0.0
  %v885 = vadd.f32 %v832, %v884
  %v886 = vrot.slane %v885, 4
  %v887 = vadd.f32 %v885, %v886
  %v888 = vrot.slane %v887, 2
  %v889 = vadd.f32 %v887, %v888
  %v890 = vrot.slane %v889, 1
  %v891 = vadd.f32 %v889, %v890
  %v892 = vsel %vm82, %v835, 0.0
  %v893 = vadd.f32 %v834, %v892
  %v894 = vrot.slane %v893, 4
  %v895 = vadd.f32 %v893, %v894
  %v896 = vrot.slane %v895, 2
  %v897 = vadd.f32 %v895, %v896
  %v898 = vrot.slane %v897, 1
  %v899 = vadd.f32 %v897, %v898
  %v908 = vsel %vm155, %v851, %v843
  %v909 = vsel %vm157, %v859, %v908
  %v910 = vsel %vm159, %v867, %v909
  %v911 = vsel %vm161, %v875, %v910
  %v912 = vsel %vm163, %v883, %v911
  %v913 = vsel %vm165, %v891, %v912
  %v914 = vsel %vm167, %v899, %v913
  %916 = vst [vmem:[#allocation2 + $0x30] sm:$0xff] %v914
  %v917 = vsub.f32 %v14, 0.1428942
  %v918 = vsub.f32 %v15, 0.1428942
  %v919 = vsub.f32 %v16, 0.1428942
  %v920 = vsub.f32 %v17, 0.1428942
  %v921 = vsub.f32 %v18, 0.1428942
  %v922 = vsub.f32 %v19, 0.1428942
  %v923 = vmul.f32 %v917, %v917
  %v924 = vmul.f32 %v918, %v918
  %v925 = vmul.f32 %v919, %v919
  %v926 = vmul.f32 %v920, %v920
  %v927 = vadd.f32 %v923, %v925
  %v928 = vadd.f32 %v924, %v926
  %v929 = vmul.f32 %v921, %v921
  %v930 = vmul.f32 %v922, %v922
  %v931 = vadd.f32 %v927, %v929
  %v932 = vadd.f32 %v928, %v930
  %v933 = vrsqrt.pop %v931
  %v934 = vmul.f32 %v931, %v933
  %vm935 = vcmp.eq.f32.partialorder %v931, inf
  %v936 = vsel %vm935, %v931, %v934
  %vm937 = vcmp.eq.f32.partialorder %v931, 0.0
  %v938 = vand.u32 %v931, 2147483648
  %v939 = vsel %vm937, %v938, %v936
  %v940 = vrsqrt.pop %v932
  %v941 = vmul.f32 %v932, %v940
  %vm942 = vcmp.eq.f32.partialorder %v932, inf
  %v943 = vsel %vm942, %v932, %v941
  %vm944 = vcmp.eq.f32.partialorder %v932, 0.0
  %v945 = vand.u32 %v932, 2147483648
  %v946 = vsel %vm944, %v945, %v943
  %v947 = vmul.f32 %v939, 2.6666667
  %v948 = vmul.f32 %v946, 2.6666667
  %v949 = vsub.f32 1.0, %v947
  %v950 = vsub.f32 1.0, %v948
  %v951 = vmax.f32 %v949, 0.0
  %v952 = vmax.f32 %v950, 0.0
  %v953 = vmul.f32 %v951, %v20
  %v954 = vmul.f32 %v952, %v21
  %v955 = vmul.f32 %v951, %v22
  %v956 = vmul.f32 %v952, %v23
  %v957 = vmul.f32 %v951, %v24
  %v958 = vmul.f32 %v952, %v25
  %v959 = vmul.f32 %v951, %v26
  %v960 = vmul.f32 %v952, %v27
  %v961 = vmul.f32 %v951, %v28
  %v962 = vmul.f32 %v952, %v29
  %v963 = vmul.f32 %v951, %v30
  %v964 = vmul.f32 %v952, %v31
  %v965 = vmul.f32 %v951, %v32
  %v966 = vmul.f32 %v952, %v33
  %v967 = vmul.f32 %v951, %v34
  %v968 = vmul.f32 %v952, %v35
  %v969 = vsel %vm82, %v954, 0.0
  %v970 = vadd.f32 %v953, %v969
  %v971 = vrot.slane %v970, 4
  %v972 = vadd.f32 %v970, %v971
  %v973 = vrot.slane %v972, 2
  %v974 = vadd.f32 %v972, %v973
  %v975 = vrot.slane %v974, 1
  %v976 = vadd.f32 %v974, %v975
  %v977 = vsel %vm82, %v956, 0.0
  %v978 = vadd.f32 %v955, %v977
  %v979 = vrot.slane %v978, 4
  %v980 = vadd.f32 %v978, %v979
  %v981 = vrot.slane %v980, 2
  %v982 = vadd.f32 %v980, %v981
  %v983 = vrot.slane %v982, 1
  %v984 = vadd.f32 %v982, %v983
  %v985 = vsel %vm82, %v958, 0.0
  %v986 = vadd.f32 %v957, %v985
  %v987 = vrot.slane %v986, 4
  %v988 = vadd.f32 %v986, %v987
  %v989 = vrot.slane %v988, 2
  %v990 = vadd.f32 %v988, %v989
  %v991 = vrot.slane %v990, 1
  %v992 = vadd.f32 %v990, %v991
  %v993 = vsel %vm82, %v960, 0.0
  %v994 = vadd.f32 %v959, %v993
  %v995 = vrot.slane %v994, 4
  %v996 = vadd.f32 %v994, %v995
  %v997 = vrot.slane %v996, 2
  %v998 = vadd.f32 %v996, %v997
  %v999 = vrot.slane %v998, 1
  %v1000 = vadd.f32 %v998, %v999
  %v1001 = vsel %vm82, %v962, 0.0
  %v1002 = vadd.f32 %v961, %v1001
  %v1003 = vrot.slane %v1002, 4
  %v1004 = vadd.f32 %v1002, %v1003
  %v1005 = vrot.slane %v1004, 2
  %v1006 = vadd.f32 %v1004, %v1005
  %v1007 = vrot.slane %v1006, 1
  %v1008 = vadd.f32 %v1006, %v1007
  %v1009 = vsel %vm82, %v964, 0.0
  %v1010 = vadd.f32 %v963, %v1009
  %v1011 = vrot.slane %v1010, 4
  %v1012 = vadd.f32 %v1010, %v1011
  %v1013 = vrot.slane %v1012, 2
  %v1014 = vadd.f32 %v1012, %v1013
  %v1015 = vrot.slane %v1014, 1
  %v1016 = vadd.f32 %v1014, %v1015
  %v1017 = vsel %vm82, %v966, 0.0
  %v1018 = vadd.f32 %v965, %v1017
  %v1019 = vrot.slane %v1018, 4
  %v1020 = vadd.f32 %v1018, %v1019
  %v1021 = vrot.slane %v1020, 2
  %v1022 = vadd.f32 %v1020, %v1021
  %v1023 = vrot.slane %v1022, 1
  %v1024 = vadd.f32 %v1022, %v1023
  %v1025 = vsel %vm82, %v968, 0.0
  %v1026 = vadd.f32 %v967, %v1025
  %v1027 = vrot.slane %v1026, 4
  %v1028 = vadd.f32 %v1026, %v1027
  %v1029 = vrot.slane %v1028, 2
  %v1030 = vadd.f32 %v1028, %v1029
  %v1031 = vrot.slane %v1030, 1
  %v1032 = vadd.f32 %v1030, %v1031
  %v1041 = vsel %vm155, %v984, %v976
  %v1042 = vsel %vm157, %v992, %v1041
  %v1043 = vsel %vm159, %v1000, %v1042
  %v1044 = vsel %vm161, %v1008, %v1043
  %v1045 = vsel %vm163, %v1016, %v1044
  %v1046 = vsel %vm165, %v1024, %v1045
  %v1047 = vsel %vm167, %v1032, %v1046
  %1049 = vst [vmem:[#allocation2 + $0x38] sm:$0xff] %v1047
  %v1050 = vld [vmem:[%s2] sm:$0xff]
  %v1051 = vld [vmem:[%s2 + $0x8] sm:$0xff]
  %v1052 = vld [vmem:[%s2 + $0x10] sm:$0xff]
  %v1053 = vld [vmem:[%s2 + $0x18] sm:$0xff]
  %v1054 = vld [vmem:[%s2 + $0x20] sm:$0xff]
  %v1055 = vld [vmem:[%s2 + $0x28] sm:$0xff]
  %v1056 = vld [vmem:[%s2 + $0x30] sm:$0xff]
  %v1057 = vld [vmem:[%s2 + $0x38] sm:$0xff]
  %v1058 = vld [vmem:[%s2 + $0x40] sm:$0xff]
  %v1059 = vld [vmem:[%s2 + $0x48] sm:$0xff]
  %v1060 = vld [vmem:[%s2 + $0x50] sm:$0xff]
  %v1061 = vld [vmem:[%s2 + $0x58] sm:$0xff]
  %v1062 = vld [vmem:[%s2 + $0x60] sm:$0xff]
  %v1063 = vld [vmem:[%s2 + $0x68] sm:$0xff]
  %v1064 = vld [vmem:[%s2 + $0x70] sm:$0xff]
  %v1065 = vld [vmem:[%s2 + $0x78] sm:$0xff]
  %v1066 = vld [vmem:[#allocation2] sm:$0xff]
  %v1067 = vld [vmem:[#allocation2 + $0x8] sm:$0xff]
  %v1068 = vld [vmem:[#allocation2 + $0x10] sm:$0xff]
  %v1069 = vld [vmem:[#allocation2 + $0x18] sm:$0xff]
  %v1070 = vld [vmem:[#allocation2 + $0x20] sm:$0xff]
  %v1071 = vld [vmem:[#allocation2 + $0x28] sm:$0xff]
  %v1072 = vld [vmem:[#allocation2 + $0x30] sm:$0xff]
  %v1073 = vld [vmem:[#allocation2 + $0x38] sm:$0xff]
  %vm1074 = vcmask 523264
  %v1076 = vsel %vm1074, %v1050, 0
  %v1079 = vsel %vm1074, %v1051, 0
  %v1082 = vsel %vm1074, %v1052, 0
  %v1085 = vsel %vm1074, %v1053, 0
  %v1088 = vsel %vm1074, %v1054, 0
  %v1091 = vsel %vm1074, %v1055, 0
  %v1094 = vsel %vm1074, %v1056, 0
  %v1097 = vsel %vm1074, %v1057, 0
  %v1100 = vsel %vm1074, %v1058, 0
  %v1103 = vsel %vm1074, %v1059, 0
  %v1106 = vsel %vm1074, %v1060, 0
  %v1109 = vsel %vm1074, %v1061, 0
  %v1112 = vsel %vm1074, %v1062, 0
  %v1115 = vsel %vm1074, %v1063, 0
  %v1118 = vsel %vm1074, %v1064, 0
  %v1121 = vsel %vm1074, %v1065, 0
  %1123 = vmatprep.subr.mxu0 0.0
  %1124 = vmatpush1.msra.mxu0 %v1066
  %1125 = vmatprep.subr.mxu0 0.0
  %1126 = vmatpush1.msra.mxu0 %v1067
  %1127 = vmatprep.subr.mxu0 0.0
  %1128 = vmatpush1.msra.mxu0 %v1068
  %1129 = vmatprep.subr.mxu0 0.0
  %1130 = vmatpush1.msra.mxu0 %v1069
  %1131 = vmatprep.subr.mxu0 0.0
  %1132 = vmatpush1.msra.mxu0 %v1070
  %1133 = vmatprep.subr.mxu0 0.0
  %1134 = vmatpush1.msra.mxu0 %v1071
  %1135 = vmatprep.subr.mxu0 0.0
  %1136 = vmatpush1.msra.mxu0 %v1072
  %1137 = vmatprep.subr.mxu0 0.0
  %1138 = vmatpush1.msra.mxu0 %v1073
  %1139 = vmatprep.subr.mxu0 0.0
  %1140 = vmatpush1.msra.mxu0 0.0
  %1141 = vmatprep.subr.mxu0 0.0
  %1142 = vmatpush1.msra.mxu0 0.0
  %1143 = vmatprep.subr.mxu0 0.0
  %1144 = vmatpush1.msra.mxu0 0.0
  %1145 = vmatprep.subr.mxu0 0.0
  %1146 = vmatpush1.msra.mxu0 0.0
  %1147 = vmatprep.subr.mxu0 0.0
  %1148 = vmatpush1.msra.mxu0 0.0
  %1149 = vmatprep.subr.mxu0 0.0
  %1150 = vmatpush1.msra.mxu0 0.0
  %1151 = vmatprep.subr.mxu0 0.0
  %1152 = vmatpush1.msra.mxu0 0.0
  %1153 = vmatprep.subr.mxu0 0.0
  %1154 = vmatpush1.msra.mxu0 0.0
  %1155 = vmatprep.subr.mxu0 0.0
  %1156 = vmatpush1.msra.mxu0 0.0
  %1157 = vmatprep.subr.mxu0 0.0
  %1158 = vmatpush1.msra.mxu0 0.0
  %1159 = vmatprep.subr.mxu0 0.0
  %1160 = vmatpush1.msra.mxu0 0.0
  %1161 = vmatprep.subr.mxu0 0.0
  %1162 = vmatpush1.msra.mxu0 0.0
  %1163 = vmatprep.subr.mxu0 0.0
  %1164 = vmatpush1.msra.mxu0 0.0
  %1165 = vmatprep.subr.mxu0 0.0
  %1166 = vmatpush1.msra.mxu0 0.0
  %1167 = vmatprep.subr.mxu0 0.0
  %1168 = vmatpush1.msra.mxu0 0.0
  %1169 = vmatprep.subr.mxu0 0.0
  %1170 = vmatpush1.msra.mxu0 0.0
  %1171 = vmatprep.subr.mxu0 0.0
  %1172 = vmatpush1.msra.mxu0 0.0
  %1173 = vmatprep.subr.mxu0 0.0
  %1174 = vmatpush1.msra.mxu0 0.0
  %1175 = vmatprep.subr.mxu0 0.0
  %1176 = vmatpush1.msra.mxu0 0.0
  %1177 = vmatprep.subr.mxu0 0.0
  %1178 = vmatpush1.msra.mxu0 0.0
  %1179 = vmatprep.subr.mxu0 0.0
  %1180 = vmatpush1.msra.mxu0 0.0
  %1181 = vmatprep.subr.mxu0 0.0
  %1182 = vmatpush1.msra.mxu0 0.0
  %1183 = vmatprep.subr.mxu0 0.0
  %1184 = vmatpush1.msra.mxu0 0.0
  %1185 = vmatprep.subr.mxu0 0.0
  %1186 = vmatpush1.msra.mxu0 0.0
  %1187 = vmatprep.mubr.f32.mxu0 0.0
  %1188 = vmatmul.mubr.f32.gmra.mrb[0].mxu0 %v1076
  %v1189 = vpop.f32.mrb[0].mxu0
  %v1190 = vadd.f32 0.0, %v1189
  %v1191 = vpop.f32.mrb[0].mxu0
  %1192 = vmatprep.mubr.f32.mxu0 0.0
  %1193 = vmatmul.mubr.f32.gmra.mrb[0].mxu0 %v1079
  %v1194 = vpop.f32.mrb[0].mxu0
  %v1195 = vadd.f32 0.0, %v1194
  %v1196 = vpop.f32.mrb[0].mxu0
  %1197 = vmatprep.mubr.f32.mxu0 0.0
  %1198 = vmatmul.mubr.f32.gmra.mrb[0].mxu0 %v1082
  %v1199 = vpop.f32.mrb[0].mxu0
  %v1200 = vadd.f32 0.0, %v1199
  %v1201 = vpop.f32.mrb[0].mxu0
  %1202 = vmatprep.mubr.f32.mxu0 0.0
  %1203 = vmatmul.mubr.f32.gmra.mrb[0].mxu0 %v1085
  %v1204 = vpop.f32.mrb[0].mxu0
  %v1205 = vadd.f32 0.0, %v1204
  %v1206 = vpop.f32.mrb[0].mxu0
  %1207 = vmatprep.mubr.f32.mxu0 0.0
  %1208 = vmatmul.mubr.f32.gmra.mrb[0].mxu0 %v1088
  %v1209 = vpop.f32.mrb[0].mxu0
  %v1210 = vadd.f32 0.0, %v1209
  %v1211 = vpop.f32.mrb[0].mxu0
  %1212 = vmatprep.mubr.f32.mxu0 0.0
  %1213 = vmatmul.mubr.f32.gmra.mrb[0].mxu0 %v1091
  %v1214 = vpop.f32.mrb[0].mxu0
  %v1215 = vadd.f32 0.0, %v1214
  %v1216 = vpop.f32.mrb[0].mxu0
  %1217 = vmatprep.mubr.f32.mxu0 0.0
  %1218 = vmatmul.mubr.f32.gmra.mrb[0].mxu0 %v1094
  %v1219 = vpop.f32.mrb[0].mxu0
  %v1220 = vadd.f32 0.0, %v1219
  %v1221 = vpop.f32.mrb[0].mxu0
  %1222 = vmatprep.mubr.f32.mxu0 0.0
  %1223 = vmatmul.mubr.f32.gmra.mrb[0].mxu0 %v1097
  %v1224 = vpop.f32.mrb[0].mxu0
  %v1225 = vadd.f32 0.0, %v1224
  %v1226 = vpop.f32.mrb[0].mxu0
  %1227 = vmatprep.mubr.f32.mxu0 0.0
  %1228 = vmatmul.mubr.f32.gmra.mrb[0].mxu0 %v1100
  %v1229 = vpop.f32.mrb[0].mxu0
  %v1230 = vadd.f32 0.0, %v1229
  %v1231 = vpop.f32.mrb[0].mxu0
  %1232 = vmatprep.mubr.f32.mxu0 0.0
  %1233 = vmatmul.mubr.f32.gmra.mrb[0].mxu0 %v1103
  %v1234 = vpop.f32.mrb[0].mxu0
  %v1235 = vadd.f32 0.0, %v1234
  %v1236 = vpop.f32.mrb[0].mxu0
  %1237 = vmatprep.mubr.f32.mxu0 0.0
  %1238 = vmatmul.mubr.f32.gmra.mrb[0].mxu0 %v1106
  %v1239 = vpop.f32.mrb[0].mxu0
  %v1240 = vadd.f32 0.0, %v1239
  %v1241 = vpop.f32.mrb[0].mxu0
  %1242 = vmatprep.mubr.f32.mxu0 0.0
  %1243 = vmatmul.mubr.f32.gmra.mrb[0].mxu0 %v1109
  %v1244 = vpop.f32.mrb[0].mxu0
  %v1245 = vadd.f32 0.0, %v1244
  %v1246 = vpop.f32.mrb[0].mxu0
  %1247 = vmatprep.mubr.f32.mxu0 0.0
  %1248 = vmatmul.mubr.f32.gmra.mrb[0].mxu0 %v1112
  %v1249 = vpop.f32.mrb[0].mxu0
  %v1250 = vadd.f32 0.0, %v1249
  %v1251 = vpop.f32.mrb[0].mxu0
  %1252 = vmatprep.mubr.f32.mxu0 0.0
  %1253 = vmatmul.mubr.f32.gmra.mrb[0].mxu0 %v1115
  %v1254 = vpop.f32.mrb[0].mxu0
  %v1255 = vadd.f32 0.0, %v1254
  %v1256 = vpop.f32.mrb[0].mxu0
  %1257 = vmatprep.mubr.f32.mxu0 0.0
  %1258 = vmatmul.mubr.f32.gmra.mrb[0].mxu0 %v1118
  %v1259 = vpop.f32.mrb[0].mxu0
  %v1260 = vadd.f32 0.0, %v1259
  %v1261 = vpop.f32.mrb[0].mxu0
  %1262 = vmatprep.mubr.f32.mxu0 0.0
  %1263 = vmatmul.mubr.f32.gmra.mrb[0].mxu0 %v1121
  %v1264 = vpop.f32.mrb[0].mxu0
  %v1265 = vadd.f32 0.0, %v1264
  %v1266 = vpop.f32.mrb[0].mxu0
  %1267 = vdwg.mxu0
  %1268 = vst [vmem:[%s3] sm:$0xff] %v1190
  %1269 = vst [vmem:[%s3 + $0x8] sm:$0xff] %v1195
  %1270 = vst [vmem:[%s3 + $0x10] sm:$0xff] %v1200
  %1271 = vst [vmem:[%s3 + $0x18] sm:$0xff] %v1205
  %1272 = vst [vmem:[%s3 + $0x20] sm:$0xff] %v1210
  %1273 = vst [vmem:[%s3 + $0x28] sm:$0xff] %v1215
  %1274 = vst [vmem:[%s3 + $0x30] sm:$0xff] %v1220
  %1275 = vst [vmem:[%s3 + $0x38] sm:$0xff] %v1225
  %1276 = vst [vmem:[%s3 + $0x40] sm:$0xff] %v1230
  %1277 = vst [vmem:[%s3 + $0x48] sm:$0xff] %v1235
  %1278 = vst [vmem:[%s3 + $0x50] sm:$0xff] %v1240
  %1279 = vst [vmem:[%s3 + $0x58] sm:$0xff] %v1245
  %1280 = vst [vmem:[%s3 + $0x60] sm:$0xff] %v1250
  %1281 = vst [vmem:[%s3 + $0x68] sm:$0xff] %v1255
  %1282 = vst [vmem:[%s3 + $0x70] sm:$0xff] %v1260
  %1283 = vst [vmem:[%s3 + $0x78] sm:$0xff] %v1265
  // Predicated region
  $region14: #{_knn_gather_kpconv.1} parent=0 // pred_check
    _
  $region15: #{_knn_gather_kpconv.1} parent=0 // pred_check_branch
    %1285 = sbr.rel (0) target = $region17
  $region16: #{_knn_gather_kpconv.1} parent=0 // pred_region
    _
  $region17: #{_knn_gather_kpconv.1} parent=0 // pred_fallthru
    _
  // Predicated region
  $region18: #{_knn_gather_kpconv.1} parent=0 // pred_check
    _
  $region19: #{_knn_gather_kpconv.1} parent=0 // pred_check_branch
    %1287 = sbr.rel (0) target = $region21
  $region20: #{_knn_gather_kpconv.1} parent=0 // pred_region
    _
  $region21: #{_knn_gather_kpconv.1} parent=0 // pred_fallthru
    _

</llo_original>
